<compile_context>
chip_gen: v6e
topology: v6e:2x2x1
jax: 0.10.0
libtpu: 0.0.40
codegen_flags: <defaults>
</compile_context>

<pallas_src>
import functools

import jax
import jax.numpy as jnp
from jax.experimental import pallas as pl
from jax.experimental.pallas import tpu as pltpu


def _topk_ce_kernel(pred_ref, tgt_ref, out_ref, loss_acc, cnt_acc, *, pad_index_label):
    """One (batch_tile, seq_tile) block of the per-item masked-average CE.

    pred_ref: (TN, C, TS)  logits block (any float dtype, upcast to f32)
    tgt_ref : (TN, TS)     int32 labels block
    out_ref : (TN, 1)      per-item average loss (written on last seq tile)
    loss_acc, cnt_acc: (TN, 1) f32 VMEM accumulators across the seq grid axis.
    """
    j = pl.program_id(1)  # sequence-tile index (reduction axis, last in grid)

    @pl.when(j == 0)
    def _init():
        loss_acc[...] = jnp.zeros_like(loss_acc)
        cnt_acc[...] = jnp.zeros_like(cnt_acc)

    logits = pred_ref[...].astype(jnp.float32)          # (TN, C, TS)
    tgt = tgt_ref[...]                                  # (TN, TS) int32

    valid = tgt != pad_index_label                      # (TN, TS) bool
    tgt_z = jnp.where(valid, tgt, 0)                    # (TN, TS)

    # Per-position cross entropy: logsumexp over classes - logit[target].
    # Class axis = sublanes, sequence axis = lanes (fully dense at TS=128).
    m = jnp.max(logits, axis=1, keepdims=True)                             # (TN, 1, TS)
    lse = jnp.log(jnp.sum(jnp.exp(logits - m), axis=1)) + m[:, 0, :]       # (TN, TS)
    cls_iota = jax.lax.broadcasted_iota(jnp.int32, logits.shape, 1)        # (TN, C, TS)
    picked = jnp.sum(
        jnp.where(cls_iota == tgt_z[:, None, :], logits, 0.0), axis=1
    )                                                                      # (TN, TS)
    # Mask only the final per-position loss (padded positions contribute 0).
    loss = jnp.where(valid, lse - picked, 0.0)                             # (TN, TS)

    loss_acc[...] += jnp.sum(loss, axis=-1, keepdims=True)                 # (TN, 1)
    cnt_acc[...] += jnp.sum(valid.astype(jnp.float32), axis=-1, keepdims=True)

    @pl.when(j == pl.num_programs(1) - 1)
    def _finalize():
        # Per-item masked average.  NOTE: like the PyTorch reference, a row
        # with zero valid positions yields NaN (0 * inf here, 0/0 there).
        out_ref[...] = loss_acc[...] * pl.reciprocal(cnt_acc[...], approx=True)


def top_k_cross_entropy_loss(predicted, target, *, k, pad_index_label=-1,
                             batch_tile=8, seq_tile=128):
    """Pallas TPU implementation of TopKCrossEntropyLoss.forward.

    predicted: (N, C, S) float (f32 or bf16), target: (N, S) int labels.
    """
    N, C, S = predicted.shape
    assert target.shape == (N, S), (predicted.shape, target.shape)
    k_eff = min(k, N)

    tgt = target.astype(jnp.int32)

    # Pad batch to a multiple of batch_tile and sequence to a multiple of
    # seq_tile (=128 lanes).  Padded positions carry pad_index_label so they
    # contribute nothing; padded batch rows are sliced off before the top-k.
    n_pad = (-N) % batch_tile
    s_pad = (-S) % seq_tile
    if n_pad or s_pad:
        predicted = jnp.pad(predicted, ((0, n_pad), (0, 0), (0, s_pad)))
        tgt = jnp.pad(tgt, ((0, n_pad), (0, s_pad)),
                      constant_values=pad_index_label)
    n_p, s_p = N + n_pad, S + s_pad

    grid = (n_p // batch_tile, s_p // seq_tile)
    kernel = functools.partial(_topk_ce_kernel, pad_index_label=pad_index_label)

    per_item = pl.pallas_call(
        kernel,
        out_shape=jax.ShapeDtypeStruct((n_p, 1), jnp.float32),
        grid_spec=pltpu.PrefetchScalarGridSpec(
            num_scalar_prefetch=0,
            grid=grid,
            in_specs=[
                # Logits: full class axis per block, 128-wide sequence tile.
                pl.BlockSpec((batch_tile, C, seq_tile), lambda i, j: (i, 0, j)),
                # Labels: same (batch, seq) tiling, lane-major sequence.
                pl.BlockSpec((batch_tile, seq_tile), lambda i, j: (i, j)),
            ],
            # Same output block across the seq axis -> resident accumulator.
            out_specs=pl.BlockSpec((batch_tile, 1), lambda i, j: (i, 0)),
            scratch_shapes=[
                pltpu.VMEM((batch_tile, 1), jnp.float32),  # loss sum
                pltpu.VMEM((batch_tile, 1), jnp.float32),  # valid count
            ],
        ),
        compiler_params=pltpu.CompilerParams(
            dimension_semantics=("parallel", "arbitrary"),
            vmem_limit_bytes=32 * 1024 * 1024,
        ),
    )(predicted, tgt)

    avg_per_item = per_item[:N, 0]                       # drop batch padding
    # Tiny epilogue over N scalars: done in the wrapper per the perf review.
    topk_vals, _ = jax.lax.top_k(avg_per_item, k_eff)
    return jnp.mean(topk_vals)


def _reference_loss(predicted, target, *, k, pad_index_label=-1):
    """Plain-JAX transcription of the PyTorch module (correctness check)."""
    pred = predicted.astype(jnp.float32)
    mask = (target != pad_index_label).astype(jnp.float32)
    pz = pred * mask[:, None, :]
    tz = jnp.where(target != pad_index_label, target, 0)
    logp = jax.nn.log_softmax(pz, axis=1)
    ce = -jnp.take_along_axis(logp, tz[:, None, :], axis=1)[:, 0, :]
    loss = ce * mask
    avg = loss.sum(axis=1) / mask.sum(axis=1)
    k_eff = min(k, target.shape[0])
    topk_vals, _ = jax.lax.top_k(avg, k_eff)
    return jnp.mean(topk_vals)


if __name__ == "__main__":
    N, C, S = 12, 96, 200       # batch, num_classes, sequence length
    K = 4                       # top-k hardest samples
    PAD = -1

    key = jax.random.PRNGKey(0)
    k1, k2 = jax.random.split(key)
    # bf16 logits from HBM (halves bandwidth); kernel upcasts to f32 internally.
    predicted = jax.random.normal(k1, (N, C, S), dtype=jnp.float32).astype(jnp.bfloat16)
    target = jax.random.randint(k2, (N, S), 0, C, dtype=jnp.int32)
    # Pad the tail positions of every other row (each row keeps valid positions).
    pad_mask = (jnp.arange(S)[None, :] >= S - 37) & (jnp.arange(N)[:, None] % 2 == 1)
    target = jnp.where(pad_mask, PAD, target)

    out = jax.block_until_ready(
        top_k_cross_entropy_loss(predicted, target, k=K, pad_index_label=PAD)
    )
    ref = jax.block_until_ready(
        _reference_loss(predicted, target, k=K, pad_index_label=PAD)
    )
    # Tolerance covers the approx reciprocal used for the per-item average.
    assert jnp.allclose(out, ref, rtol=5e-3, atol=1e-5), (out, ref)

    print("KERNEL_OK")
</pallas_src>

<mosaic_0001>
module attributes {stable_mosaic.version = 11 : i64} {
  func.func @_topk_ce_kernel(%arg0: i32, %arg1: i32, %arg2: memref<8x96x128xbf16, #tpu.memory_space<vmem>>, %arg3: memref<8x128xi32, #tpu.memory_space<vmem>>, %arg4: memref<8x1xf32, #tpu.memory_space<vmem>>, %arg5: memref<8x1xf32, #tpu.memory_space<vmem>>, %arg6: memref<8x1xf32, #tpu.memory_space<vmem>>) attributes {dimension_semantics = [#tpu.dimension_semantics<parallel>, #tpu.dimension_semantics<arbitrary>], iteration_bounds = array<i64: 2, 2>, scalar_prefetch = 0 : i64, scratch_operands = 2 : i64, tpu.core_type = #tpu.core_type<tc>, window_params = [{transform_indices = @transform_0, window_bounds = array<i64: 8, 96, 128>}, {transform_indices = @transform_1, window_bounds = array<i64: 8, 128>}, {transform_indices = @transform_2, window_bounds = array<i64: 8, 1>}]} {
    %c0_i32 = arith.constant 0 : i32
    %0 = arith.cmpi eq, %arg1, %c0_i32 : i32
    %1 = arith.extui %0 : i1 to i32
    %c0_i32_0 = arith.constant 0 : i32
    %2 = arith.cmpi ne, %1, %c0_i32_0 : i32
    scf.if %2 {
      %cst_21 = arith.constant 0.000000e+00 : f32
      %44 = vector.broadcast %cst_21 : f32 to vector<8x1xf32>
      %c0_22 = arith.constant 0 : index
      %c0_23 = arith.constant 0 : index
      %45 = vector.load %arg5[%c0_22, %c0_23] : memref<8x1xf32, #tpu.memory_space<vmem>>, vector<8x1xf32>
      tpu.vector_store %arg5[%c0_22, %c0_23], %44 {strides = array<i32>} : memref<8x1xf32, #tpu.memory_space<vmem>>, vector<8x1xf32>,
      %cst_24 = arith.constant 0.000000e+00 : f32
      %46 = vector.broadcast %cst_24 : f32 to vector<8x1xf32>
      %c0_25 = arith.constant 0 : index
      %c0_26 = arith.constant 0 : index
      %47 = vector.load %arg6[%c0_25, %c0_26] : memref<8x1xf32, #tpu.memory_space<vmem>>, vector<8x1xf32>
      tpu.vector_store %arg6[%c0_25, %c0_26], %46 {strides = array<i32>} : memref<8x1xf32, #tpu.memory_space<vmem>>, vector<8x1xf32>,
    } else {
    }
    %c0 = arith.constant 0 : index
    %c0_1 = arith.constant 0 : index
    %c0_2 = arith.constant 0 : index
    %3 = vector.load %arg2[%c0, %c0_1, %c0_2] : memref<8x96x128xbf16, #tpu.memory_space<vmem>>, vector<8x96x128xbf16>
    %4 = arith.extf %3 : vector<8x96x128xbf16> to vector<8x96x128xf32>
    %c0_3 = arith.constant 0 : index
    %c0_4 = arith.constant 0 : index
    %5 = vector.load %arg3[%c0_3, %c0_4] : memref<8x128xi32, #tpu.memory_space<vmem>>, vector<8x128xi32>
    %c-1_i32 = arith.constant -1 : i32
    %6 = vector.broadcast %c-1_i32 : i32 to vector<8x128xi32>
    %7 = arith.cmpi ne, %5, %6 : vector<8x128xi32>
    %c0_i32_5 = arith.constant 0 : i32
    %8 = vector.broadcast %c0_i32_5 : i32 to vector<8x128xi32>
    %9 = arith.select %7, %5, %8 : vector<8x128xi1>, vector<8x128xi32>
    %cst = arith.constant dense<0xFF800000> : vector<8x128xf32>
    %10 = vector.multi_reduction <maximumf>, %4, %cst [1] : vector<8x96x128xf32> to vector<8x128xf32>
    %11 = vector.shape_cast %10 : vector<8x128xf32> to vector<8x1x128xf32>
    %12 = vector.broadcast %11 : vector<8x1x128xf32> to vector<8x96x128xf32>
    %13 = arith.subf %4, %12 : vector<8x96x128xf32>
    %14 = math.exp %13 : vector<8x96x128xf32>
    %cst_6 = arith.constant dense<0.000000e+00> : vector<8x128xf32>
    %15 = vector.multi_reduction <add>, %14, %cst_6 [1] : vector<8x96x128xf32> to vector<8x128xf32>
    %16 = math.log %15 : vector<8x128xf32>
    %17 = vector.shape_cast %11 : vector<8x1x128xf32> to vector<8x128xf32>
    %18 = arith.addf %16, %17 : vector<8x128xf32>
    %19 = tpu.iota {dimensions = array<i32: 1>} : vector<8x96x128xi32>
    %20 = vector.shape_cast %9 : vector<8x128xi32> to vector<8x1x128xi32>
    %21 = vector.broadcast %20 : vector<8x1x128xi32> to vector<8x96x128xi32>
    %22 = arith.cmpi eq, %19, %21 : vector<8x96x128xi32>
    %cst_7 = arith.constant 0.000000e+00 : f32
    %23 = vector.broadcast %cst_7 : f32 to vector<8x96x128xf32>
    %24 = arith.select %22, %4, %23 : vector<8x96x128xi1>, vector<8x96x128xf32>
    %cst_8 = arith.constant dense<0.000000e+00> : vector<8x128xf32>
    %25 = vector.multi_reduction <add>, %24, %cst_8 [1] : vector<8x96x128xf32> to vector<8x128xf32>
    %26 = arith.subf %18, %25 : vector<8x128xf32>
    %cst_9 = arith.constant 0.000000e+00 : f32
    %27 = vector.broadcast %cst_9 : f32 to vector<8x128xf32>
    %28 = arith.select %7, %26, %27 : vector<8x128xi1>, vector<8x128xf32>
    %c0_10 = arith.constant 0 : index
    %c0_11 = arith.constant 0 : index
    %29 = vector.load %arg5[%c0_10, %c0_11] : memref<8x1xf32, #tpu.memory_space<vmem>>, vector<8x1xf32>
    %cst_12 = arith.constant dense<0.000000e+00> : vector<8xf32>
    %30 = vector.multi_reduction <add>, %28, %cst_12 [1] : vector<8x128xf32> to vector<8xf32>
    %31 = vector.shape_cast %30 : vector<8xf32> to vector<8x1xf32>
    %32 = arith.addf %29, %31 : vector<8x1xf32>
    %c0_13 = arith.constant 0 : index
    %c0_14 = arith.constant 0 : index
    %33 = vector.load %arg5[%c0_13, %c0_14] : memref<8x1xf32, #tpu.memory_space<vmem>>, vector<8x1xf32>
    tpu.vector_store %arg5[%c0_13, %c0_14], %32 {strides = array<i32>} : memref<8x1xf32, #tpu.memory_space<vmem>>, vector<8x1xf32>,
    %c0_15 = arith.constant 0 : index
    %c0_16 = arith.constant 0 : index
    %34 = vector.load %arg6[%c0_15, %c0_16] : memref<8x1xf32, #tpu.memory_space<vmem>>, vector<8x1xf32>
    %35 = arith.extui %7 : vector<8x128xi1> to vector<8x128xi32>
    %36 = arith.sitofp %35 : vector<8x128xi32> to vector<8x128xf32>
    %cst_17 = arith.constant dense<0.000000e+00> : vector<8xf32>
    %37 = vector.multi_reduction <add>, %36, %cst_17 [1] : vector<8x128xf32> to vector<8xf32>
    %38 = vector.shape_cast %37 : vector<8xf32> to vector<8x1xf32>
    %39 = arith.addf %34, %38 : vector<8x1xf32>
    %c0_18 = arith.constant 0 : index
    %c0_19 = arith.constant 0 : index
    %40 = vector.load %arg6[%c0_18, %c0_19] : memref<8x1xf32, #tpu.memory_space<vmem>>, vector<8x1xf32>
    tpu.vector_store %arg6[%c0_18, %c0_19], %39 {strides = array<i32>} : memref<8x1xf32, #tpu.memory_space<vmem>>, vector<8x1xf32>,
    %c1_i32 = arith.constant 1 : i32
    %41 = arith.cmpi eq, %arg1, %c1_i32 : i32
    %42 = arith.extui %41 : i1 to i32
    %c0_i32_20 = arith.constant 0 : i32
    %43 = arith.cmpi ne, %42, %c0_i32_20 : i32
    scf.if %43 {
      %c0_21 = arith.constant 0 : index
      %c0_22 = arith.constant 0 : index
      %44 = vector.load %arg5[%c0_21, %c0_22] : memref<8x1xf32, #tpu.memory_space<vmem>>, vector<8x1xf32>
      %c0_23 = arith.constant 0 : index
      %c0_24 = arith.constant 0 : index
      %45 = vector.load %arg6[%c0_23, %c0_24] : memref<8x1xf32, #tpu.memory_space<vmem>>, vector<8x1xf32>
      %46 = tpu.reciprocal %45 {approx = true} : vector<8x1xf32> -> vector<8x1xf32>
      %47 = arith.mulf %44, %46 : vector<8x1xf32>
      %c0_25 = arith.constant 0 : index
      %c0_26 = arith.constant 0 : index
      %48 = vector.load %arg4[%c0_25, %c0_26] : memref<8x1xf32, #tpu.memory_space<vmem>>, vector<8x1xf32>
      tpu.vector_store %arg4[%c0_25, %c0_26], %47 {strides = array<i32>} : memref<8x1xf32, #tpu.memory_space<vmem>>, vector<8x1xf32>,
    } else {
    }
    return
  }
  func.func @transform_0(%arg0: i32, %arg1: i32) -> (i32, i32, i32) {
    %c0_i32 = arith.constant 0 : i32
    %c0_i32_0 = arith.constant 0 : i32
    return %arg0, %c0_i32, %arg1 : i32, i32, i32
  }
  func.func @transform_1(%arg0: i32, %arg1: i32) -> (i32, i32) {
    %c0_i32 = arith.constant 0 : i32
    return %arg0, %arg1 : i32, i32
  }
  func.func @transform_2(%arg0: i32, %arg1: i32) -> (i32, i32) {
    %c0_i32 = arith.constant 0 : i32
    %c0_i32_0 = arith.constant 0 : i32
    return %arg0, %c0_i32 : i32, i32
  }
}

</mosaic_0001>

<llo_original>
// kernel: tpu_custom_call.1
$region0: #{tpu_custom_call.1}
  #allocation0 [shape = 'u32[]', space=smem, size = 0x4, offset = 0x4, fixed_abs, tag = 'smem constant byte address 0x4 - core index']
  #allocation1 [shape = 'u32[144,128]{1,0:T(1,128)}', space=vmem, size = 0x12000, scoped, tag = 'internal scratch']
  #allocation2 [shape = 'f32[8,1]{1,0:T(8,128)}', space=vmem, size = 0x1000, scoped, tag = 'scratch operand']
  #allocation3 [shape = 'f32[8,1]{1,0:T(8,128)}', space=vmem, size = 0x1000, scoped, tag = 'scratch operand']
  %s0 = inlined_call_operand.hbm [shape: bf16[16,96,256], index: 0, kind: input, shape index: {}]
  %s1 = inlined_call_operand.hbm [shape: s32[16,256], index: 1, kind: input, shape index: {}]
  %s2 = inlined_call_operand.vmem [shape: f32[16,1], index: 2, kind: output, shape index: {}]
  %s3 = sld [smem:[#allocation0]]
  $region57: #{tpu_custom_call.1} parent=0
    _
  %s5 = ssub.s32 1, %s3
  %s6 = scalar_select 0, %s5, %s3
  $region1: #{tpu_custom_call.1} parent=0
    #allocation4 [shape = 'u8[393216]{0}', space=vmem, size = 0x60000, scoped, tag = 'input window, operand 0']
    #allocation5 [shape = 's32[2]{0}', space=sflag, size = 0x8, scoped, tag = 'scoped memory for tpu_custom_call.1']
    #allocation6 [shape = 'u8[8192]{0}', space=vmem, size = 0x2000, scoped, tag = 'input window, operand 1']
    #allocation7 [shape = 's32[2]{0}', space=sflag, size = 0x8, scoped, tag = 'scoped memory for tpu_custom_call.1']
    %7 = vsyncpa [#allocation5], 0
    %s8 = scalar_lea.sflag [#allocation5], 1
    %9 = vsyncpa %s8, 0
    %10 = vsyncpa [#allocation7], 0
    %s11 = scalar_lea.sflag [#allocation7], 1
    %12 = vsyncpa %s11, 0
    loop: start=0, step=1, limit=6
    $region2: #{tpu_custom_call.1} parent=1 // loop_pre_header
      _
    $region3: #{tpu_custom_call.1} parent=1 // loop_header
      %s14 = sphi 0, %s18
      %p15 = scmp.ge.s32.totalorder %s14, 6
      %s21 = sphi 0, %s33
      %s22 = sphi 0, %s29
      %s23 = sphi 0, %s21
      %s24 = sphi 0, %s22
      %s25 = sphi 0, %s23
      %s26 = sphi 0, %s24
      %s38 = sphi 0, %s40
      %s41 = sphi 0, %s38
      %s42 = sphi 0, %s41
      %s58 = sphi 0, %s42
      %s66 = sphi 0, %s68
      %s69 = sphi 0, %s66
      %s70 = sphi 0, %s69
      %s86 = sphi 0, %s70
      %s92 = sphi 0, %s94
      %s95 = sphi 0, %s92
      %s96 = sphi 0, %s95
      %s112 = sphi 0, %s96
    $region4: #{tpu_custom_call.1} parent=1 // loop_header_branch
      %17 = sbr.rel (%p15) target = $region8
    $region5: #{tpu_custom_call.1} parent=1 // loop_body
      %s19 = ssub.s32 %s14, 1
      %s20 = ssub.s32 %s14, 2
      %s27 = sadd.s32 1, %s22
      %p28 = scmp.ge.s32.totalorder %s27, 2
      %s29 = scalar_select %p28, 0, %s27
      %s30 = sadd.s32 1, %s21
      %s31 = scalar_select %p28, %s30, %s21
      %p32 = scmp.ge.s32.totalorder %s31, 2
      %s33 = scalar_select %p32, 0, %s31
      %s34 = ssub.s32 %s21, %s33
      %s35 = ssub.s32 %s22, %s29
      %s36 = sor.u32 %s34, %s35
      %p37 = scmp.eq.s32.totalorder %s36, 0
      %s39 = sadd.s32 %s38, 1
      %s40 = scalar_select %p37, %s38, %s39
      %p43 = pneg %p37
      %p44 = scmp.eq.s32.totalorder %s14, 3
      %p45 = por %p43, %p44
      %p46 = scmp.ne.s32.totalorder %s38, %s41
      %p47 = scmp.eq.s32.totalorder %s14, 0
      %p48 = por %p46, %p47
      %p49 = scmp.ne.s32.totalorder %s38, %s41
      %p50 = scmp.eq.s32.totalorder %s19, 3
      %p51 = por %p49, %p50
      %p52 = scmp.ne.s32.totalorder %s41, %s42
      %p53 = scmp.eq.s32.totalorder %s19, 0
      %p54 = por %p52, %p53
      %p55 = scmp.ne.s32.totalorder %s41, %s42
      %p56 = scmp.eq.s32.totalorder %s20, 3
      %p57 = por %p55, %p56
      %p59 = scmp.ne.s32.totalorder %s42, %s58
      %p60 = scmp.eq.s32.totalorder %s20, 0
      %p61 = por %p59, %p60
      %s62 = ssub.s32 %s21, %s33
      %s63 = ssub.s32 %s22, %s29
      %s64 = sor.u32 %s62, %s63
      %p65 = scmp.eq.s32.totalorder %s64, 0
      %s67 = sadd.s32 %s66, 1
      %s68 = scalar_select %p65, %s66, %s67
      %p71 = pneg %p65
      %p72 = scmp.eq.s32.totalorder %s14, 3
      %p73 = por %p71, %p72
      %p74 = scmp.ne.s32.totalorder %s66, %s69
      %p75 = scmp.eq.s32.totalorder %s14, 0
      %p76 = por %p74, %p75
      %p77 = scmp.ne.s32.totalorder %s66, %s69
      %p78 = scmp.eq.s32.totalorder %s19, 3
      %p79 = por %p77, %p78
      %p80 = scmp.ne.s32.totalorder %s69, %s70
      %p81 = scmp.eq.s32.totalorder %s19, 0
      %p82 = por %p80, %p81
      %p83 = scmp.ne.s32.totalorder %s69, %s70
      %p84 = scmp.eq.s32.totalorder %s20, 3
      %p85 = por %p83, %p84
      %p87 = scmp.ne.s32.totalorder %s70, %s86
      %p88 = scmp.eq.s32.totalorder %s20, 0
      %p89 = por %p87, %p88
      %s90 = ssub.s32 %s21, %s33
      %p91 = scmp.eq.s32.totalorder %s90, 0
      %s93 = sadd.s32 %s92, 1
      %s94 = scalar_select %p91, %s92, %s93
      %p97 = pneg %p91
      %p98 = scmp.eq.s32.totalorder %s14, 3
      %p99 = por %p97, %p98
      %p100 = scmp.ne.s32.totalorder %s92, %s95
      %p101 = scmp.eq.s32.totalorder %s14, 0
      %p102 = por %p100, %p101
      %p103 = scmp.ne.s32.totalorder %s92, %s95
      %p104 = scmp.eq.s32.totalorder %s19, 3
      %p105 = por %p103, %p104
      %p106 = scmp.ne.s32.totalorder %s95, %s96
      %p107 = scmp.eq.s32.totalorder %s19, 0
      %p108 = por %p106, %p107
      %p109 = scmp.ne.s32.totalorder %s95, %s96
      %p110 = scmp.eq.s32.totalorder %s20, 3
      %p111 = por %p109, %p110
      %p113 = scmp.ne.s32.totalorder %s96, %s112
      %p114 = scmp.eq.s32.totalorder %s20, 0
      %p115 = por %p113, %p114
      %p116 = scmp.le.s32.totalorder 1, %s14
      %p117 = scmp.lt.s32.totalorder %s14, 5
      %p118 = pnand %p116, %p117
      %p119 = pneg %p118
      // Predicated region
      $region9: #{tpu_custom_call.1} parent=5 // pred_check
        _
      $region10: #{tpu_custom_call.1} parent=5 // pred_check_branch
        %121 = sbr.rel (%p118) target = $region12
      $region11: #{tpu_custom_call.1} parent=5 // pred_region
        %s122 = ssub.s32 %s14, 1
      $region12: #{tpu_custom_call.1} parent=5 // pred_fallthru
        _
      %p123 = scmp.lt.s32.totalorder %s14, 4
      // Predicated region
      $region13: #{tpu_custom_call.1} parent=5 // pred_check
        %p124 = pneg %p123
      $region14: #{tpu_custom_call.1} parent=5 // pred_check_branch
        %126 = sbr.rel (%p124) target = $region16
      $region15: #{tpu_custom_call.1} parent=5 // pred_region
        // Predicated region
        $region17: #{tpu_custom_call.1} parent=15 // pred_check
          %p127 = pneg %p48
        $region18: #{tpu_custom_call.1} parent=15 // pred_check_branch
          %129 = sbr.rel (%p127) target = $region20
        $region19: #{tpu_custom_call.1} parent=15 // pred_region
          %s130 = sand.u32 %s38, 1
          %s131 = scalar_lea.sflag [#allocation5], %s130
          %s132 = sand.u32 %s38, 1
          %s133 = smul.addr %s132, 384
          %s134 = scalar_lea.vmem [#allocation4], %s133
          %s135 = smul.u32 8, %s21
          %s137 = ssub.s32 6144, 6144
          %138 = vsyncadd %s131, %s137
          %s139 = smul.addr %s135, 24
          %s140 = sadd.s32 %s22, %s139
          %s141 = smul.addr %s140, 64
          %s142 = scalar_lea.hbm %s0, %s141
          %s143 = sshll.u32 %s134, 4
          %s144 = int_to_ptr.vmem [resolvable:$true] %s143
          %149 = dma.hbm_to_vmem [thread:$0]  %s142, 6144, %s144, %s131, 128, 64, 4
        $region20: #{tpu_custom_call.1} parent=15 // pred_fallthru
          _
        // Predicated region
        $region21: #{tpu_custom_call.1} parent=15 // pred_check
          %p150 = pneg %p76
        $region22: #{tpu_custom_call.1} parent=15 // pred_check_branch
          %152 = sbr.rel (%p150) target = $region24
        $region23: #{tpu_custom_call.1} parent=15 // pred_region
          %s153 = sand.u32 %s66, 1
          %s154 = scalar_lea.sflag [#allocation7], %s153
          %s155 = sand.u32 %s66, 1
          %s156 = smul.addr %s155, 8
          %s157 = scalar_lea.vmem [#allocation6], %s156
          %s159 = ssub.s32 128, 128
          %160 = vsyncadd %s154, %s159
          %s161 = smul.addr %s21, 2
          %s162 = sadd.s32 %s22, %s161
          %s163 = smul.addr %s162, 128
          %s164 = scalar_lea.hbm %s1, %s163
          %s166 = sshll.u32 %s157, 4
          %s167 = int_to_ptr.vmem [resolvable:$true] %s166
          %169 = dma.hbm_to_vmem [thread:$0]  %s164, 128, %s167, %s154
        $region24: #{tpu_custom_call.1} parent=15 // pred_fallthru
          _
      $region16: #{tpu_custom_call.1} parent=5 // pred_fallthru
        _
      %p170 = scmp.le.s32.totalorder 1, %s14
      %p171 = scmp.lt.s32.totalorder %s14, 5
      %p172 = pnand %p170, %p171
      %p173 = pneg %p172
      // Predicated region
      $region25: #{tpu_custom_call.1} parent=5 // pred_check
        _
      $region26: #{tpu_custom_call.1} parent=5 // pred_check_branch
        %175 = sbr.rel (%p172) target = $region28
      $region27: #{tpu_custom_call.1} parent=5 // pred_region
        %s176 = ssub.s32 %s14, 1
        %s177 = sand.u32 %s41, 1
        %s178 = scalar_lea.sflag [#allocation5], %s177
        %s179 = sand.u32 %s41, 1
        %s180 = smul.addr %s179, 384
        %s181 = scalar_lea.vmem [#allocation4], %s180
        // Predicated region
        $region29: #{tpu_custom_call.1} parent=27 // pred_check
          %p182 = pneg %p54
        $region30: #{tpu_custom_call.1} parent=27 // pred_check_branch
          %184 = sbr.rel (%p182) target = $region32
        $region31: #{tpu_custom_call.1} parent=27 // pred_region
          %185 = dma.done %s178, 6144
        $region32: #{tpu_custom_call.1} parent=27 // pred_fallthru
          _
        %s186 = sand.u32 %s69, 1
        %s187 = scalar_lea.sflag [#allocation7], %s186
        %s188 = sand.u32 %s69, 1
        %s189 = smul.addr %s188, 8
        %s190 = scalar_lea.vmem [#allocation6], %s189
        // Predicated region
        $region33: #{tpu_custom_call.1} parent=27 // pred_check
          %p191 = pneg %p82
        $region34: #{tpu_custom_call.1} parent=27 // pred_check_branch
          %193 = sbr.rel (%p191) target = $region36
        $region35: #{tpu_custom_call.1} parent=27 // pred_region
          %194 = dma.done %s187, 128
        $region36: #{tpu_custom_call.1} parent=27 // pred_fallthru
          _
        %s195 = sand.u32 %s41, 1
        %s196 = scalar_lea.sflag [#allocation5], %s195
        %s197 = sand.u32 %s41, 1
        %s198 = smul.addr %s197, 384
        %s199 = scalar_lea.vmem [#allocation4], %s198
        %p200 = pneg %p54
        %p201 = pneg %p51
        %s202 = sand.u32 %s69, 1
        %s203 = scalar_lea.sflag [#allocation7], %s202
        %s204 = sand.u32 %s69, 1
        %s205 = smul.addr %s204, 8
        %s206 = scalar_lea.vmem [#allocation6], %s205
        %p207 = pneg %p82
        %p208 = pneg %p79
        %p209 = pneg %p108
        %p210 = pneg %p105
        %p211 = scmp.lt.s32.totalorder %s23, 1
        %s212 = scalar_select %p211, %s23, 1
        %s213 = smul.addr %s212, 8
        %s214 = scalar_lea.vmem %s2, %s213
        %s215 = smul.u32 8, %s23
        %p216 = scmp.lt.s32.totalorder %s23, 1
        %s217 = scalar_select %p216, %s23, 1
        %s218 = smul.addr %s217, 8
        %s219 = scalar_lea.vmem %s2, %s218
        %p220 = scmp.eq.s32.totalorder %s24, 0
        // Predicated region
        $region37: #{tpu_custom_call.1} parent=27 // pred_check
          %p221 = pneg %p220
        $region38: #{tpu_custom_call.1} parent=27 // pred_check_branch
          %223 = sbr.rel (%p221) target = $region40
        $region39: #{tpu_custom_call.1} parent=27 // pred_region
          %vm224 = vcmask 7168
          %225 = vst.msk [vmem:[#allocation2] sm:$0xff] %vm224, 0.0
          %226 = vst.msk [vmem:[#allocation3] sm:$0xff] %vm224, 0.0
        $region40: #{tpu_custom_call.1} parent=27 // pred_fallthru
          _
        %v227 = vld [vmem:[%s181] sm:$0xf]
        %v228 = vld [vmem:[%s181 + $0x4] sm:$0xf]
        %v229 = vld [vmem:[%s181 + $0x8] sm:$0xf]
        %v230 = vld [vmem:[%s181 + $0xc] sm:$0xf]
        %v231 = vld [vmem:[%s181 + $0x10] sm:$0xf]
        %v232 = vld [vmem:[%s181 + $0x14] sm:$0xf]
        %v233 = vld [vmem:[%s181 + $0x18] sm:$0xf]
        %v234 = vld [vmem:[%s181 + $0x1c] sm:$0xf]
        %v235 = vld [vmem:[%s181 + $0x20] sm:$0xf]
        %v236 = vld [vmem:[%s181 + $0x24] sm:$0xf]
        %v237 = vld [vmem:[%s181 + $0x28] sm:$0xf]
        %v238 = vld [vmem:[%s181 + $0x2c] sm:$0xf]
        %v239 = vld [vmem:[%s181 + $0x30] sm:$0xf]
        %v240 = vld [vmem:[%s181 + $0x34] sm:$0xf]
        %v241 = vld [vmem:[%s181 + $0x38] sm:$0xf]
        %v242 = vld [vmem:[%s181 + $0x3c] sm:$0xf]
        %v243 = vld [vmem:[%s181 + $0x40] sm:$0xf]
        %v244 = vld [vmem:[%s181 + $0x44] sm:$0xf]
        %v245 = vld [vmem:[%s181 + $0x48] sm:$0xf]
        %v246 = vld [vmem:[%s181 + $0x4c] sm:$0xf]
        %v247 = vld [vmem:[%s181 + $0x50] sm:$0xf]
        %v248 = vld [vmem:[%s181 + $0x54] sm:$0xf]
        %v249 = vld [vmem:[%s181 + $0x58] sm:$0xf]
        %v250 = vld [vmem:[%s181 + $0x5c] sm:$0xf]
        %v251 = vld [vmem:[%s181 + $0x60] sm:$0xf]
        %v252 = vld [vmem:[%s181 + $0x64] sm:$0xf]
        %v253 = vld [vmem:[%s181 + $0x68] sm:$0xf]
        %v254 = vld [vmem:[%s181 + $0x6c] sm:$0xf]
        %v255 = vld [vmem:[%s181 + $0x70] sm:$0xf]
        %v256 = vld [vmem:[%s181 + $0x74] sm:$0xf]
        %v257 = vld [vmem:[%s181 + $0x78] sm:$0xf]
        %v258 = vld [vmem:[%s181 + $0x7c] sm:$0xf]
        %v259 = vld [vmem:[%s181 + $0x80] sm:$0xf]
        %v260 = vld [vmem:[%s181 + $0x84] sm:$0xf]
        %v261 = vld [vmem:[%s181 + $0x88] sm:$0xf]
        %v262 = vld [vmem:[%s181 + $0x8c] sm:$0xf]
        %v263 = vld [vmem:[%s181 + $0x90] sm:$0xf]
        %v264 = vld [vmem:[%s181 + $0x94] sm:$0xf]
        %v265 = vld [vmem:[%s181 + $0x98] sm:$0xf]
        %v266 = vld [vmem:[%s181 + $0x9c] sm:$0xf]
        %v267 = vld [vmem:[%s181 + $0xa0] sm:$0xf]
        %v268 = vld [vmem:[%s181 + $0xa4] sm:$0xf]
        %v269 = vld [vmem:[%s181 + $0xa8] sm:$0xf]
        %v270 = vld [vmem:[%s181 + $0xac] sm:$0xf]
        %v271 = vld [vmem:[%s181 + $0xb0] sm:$0xf]
        %v272 = vld [vmem:[%s181 + $0xb4] sm:$0xf]
        %v273 = vld [vmem:[%s181 + $0xb8] sm:$0xf]
        %v274 = vld [vmem:[%s181 + $0xbc] sm:$0xf]
        %v275 = vld [vmem:[%s181 + $0xc0] sm:$0xf]
        %v276 = vld [vmem:[%s181 + $0xc4] sm:$0xf]
        %v277 = vld [vmem:[%s181 + $0xc8] sm:$0xf]
        %v278 = vld [vmem:[%s181 + $0xcc] sm:$0xf]
        %v279 = vld [vmem:[%s181 + $0xd0] sm:$0xf]
        %v280 = vld [vmem:[%s181 + $0xd4] sm:$0xf]
        %v281 = vld [vmem:[%s181 + $0xd8] sm:$0xf]
        %v282 = vld [vmem:[%s181 + $0xdc] sm:$0xf]
        %v283 = vld [vmem:[%s181 + $0xe0] sm:$0xf]
        %v284 = vld [vmem:[%s181 + $0xe4] sm:$0xf]
        %v285 = vld [vmem:[%s181 + $0xe8] sm:$0xf]
        %v286 = vld [vmem:[%s181 + $0xec] sm:$0xf]
        %v287 = vld [vmem:[%s181 + $0xf0] sm:$0xf]
        %v288 = vld [vmem:[%s181 + $0xf4] sm:$0xf]
        %v289 = vld [vmem:[%s181 + $0xf8] sm:$0xf]
        %v290 = vld [vmem:[%s181 + $0xfc] sm:$0xf]
        %v291 = vld [vmem:[%s181 + $0x100] sm:$0xf]
        %v292 = vld [vmem:[%s181 + $0x104] sm:$0xf]
        %v293 = vld [vmem:[%s181 + $0x108] sm:$0xf]
        %v294 = vld [vmem:[%s181 + $0x10c] sm:$0xf]
        %v295 = vld [vmem:[%s181 + $0x110] sm:$0xf]
        %v296 = vld [vmem:[%s181 + $0x114] sm:$0xf]
        %v297 = vld [vmem:[%s181 + $0x118] sm:$0xf]
        %v298 = vld [vmem:[%s181 + $0x11c] sm:$0xf]
        %v299 = vld [vmem:[%s181 + $0x120] sm:$0xf]
        %v300 = vld [vmem:[%s181 + $0x124] sm:$0xf]
        %v301 = vld [vmem:[%s181 + $0x128] sm:$0xf]
        %v302 = vld [vmem:[%s181 + $0x12c] sm:$0xf]
        %v303 = vld [vmem:[%s181 + $0x130] sm:$0xf]
        %v304 = vld [vmem:[%s181 + $0x134] sm:$0xf]
        %v305 = vld [vmem:[%s181 + $0x138] sm:$0xf]
        %v306 = vld [vmem:[%s181 + $0x13c] sm:$0xf]
        %v307 = vld [vmem:[%s181 + $0x140] sm:$0xf]
        %v308 = vld [vmem:[%s181 + $0x144] sm:$0xf]
        %v309 = vld [vmem:[%s181 + $0x148] sm:$0xf]
        %v310 = vld [vmem:[%s181 + $0x14c] sm:$0xf]
        %v311 = vld [vmem:[%s181 + $0x150] sm:$0xf]
        %v312 = vld [vmem:[%s181 + $0x154] sm:$0xf]
        %v313 = vld [vmem:[%s181 + $0x158] sm:$0xf]
        %v314 = vld [vmem:[%s181 + $0x15c] sm:$0xf]
        %v315 = vld [vmem:[%s181 + $0x160] sm:$0xf]
        %v316 = vld [vmem:[%s181 + $0x164] sm:$0xf]
        %v317 = vld [vmem:[%s181 + $0x168] sm:$0xf]
        %v318 = vld [vmem:[%s181 + $0x16c] sm:$0xf]
        %v319 = vld [vmem:[%s181 + $0x170] sm:$0xf]
        %v320 = vld [vmem:[%s181 + $0x174] sm:$0xf]
        %v321 = vld [vmem:[%s181 + $0x178] sm:$0xf]
        %v322 = vld [vmem:[%s181 + $0x17c] sm:$0xf]
        %v323 = vunpack.c.l.bf16 %v227
        %v324 = vunpack.c.l.bf16 %v228
        %v325 = vunpack.c.l.bf16 %v229
        %v326 = vunpack.c.l.bf16 %v230
        %v327 = vunpack.c.l.bf16 %v231
        %v328 = vunpack.c.l.bf16 %v232
        %v329 = vunpack.c.l.bf16 %v233
        %v330 = vunpack.c.l.bf16 %v234
        %v331 = vunpack.c.l.bf16 %v235
        %v332 = vunpack.c.l.bf16 %v236
        %v333 = vunpack.c.l.bf16 %v237
        %v334 = vunpack.c.l.bf16 %v238
        %v335 = vunpack.c.l.bf16 %v239
        %v336 = vunpack.c.l.bf16 %v240
        %v337 = vunpack.c.l.bf16 %v241
        %v338 = vunpack.c.l.bf16 %v242
        %v339 = vunpack.c.l.bf16 %v243
        %v340 = vunpack.c.l.bf16 %v244
        %v341 = vunpack.c.l.bf16 %v245
        %v342 = vunpack.c.l.bf16 %v246
        %v343 = vunpack.c.l.bf16 %v247
        %v344 = vunpack.c.l.bf16 %v248
        %v345 = vunpack.c.l.bf16 %v249
        %v346 = vunpack.c.l.bf16 %v250
        %v347 = vunpack.c.l.bf16 %v251
        %v348 = vunpack.c.l.bf16 %v252
        %v349 = vunpack.c.l.bf16 %v253
        %v350 = vunpack.c.l.bf16 %v254
        %v351 = vunpack.c.l.bf16 %v255
        %v352 = vunpack.c.l.bf16 %v256
        %v353 = vunpack.c.l.bf16 %v257
        %v354 = vunpack.c.l.bf16 %v258
        %v355 = vunpack.c.l.bf16 %v259
        %v356 = vunpack.c.l.bf16 %v260
        %v357 = vunpack.c.l.bf16 %v261
        %v358 = vunpack.c.l.bf16 %v262
        %v359 = vunpack.c.l.bf16 %v263
        %v360 = vunpack.c.l.bf16 %v264
        %v361 = vunpack.c.l.bf16 %v265
        %v362 = vunpack.c.l.bf16 %v266
        %v363 = vunpack.c.l.bf16 %v267
        %v364 = vunpack.c.l.bf16 %v268
        %v365 = vunpack.c.l.bf16 %v269
        %v366 = vunpack.c.l.bf16 %v270
        %v367 = vunpack.c.l.bf16 %v271
        %v368 = vunpack.c.l.bf16 %v272
        %v369 = vunpack.c.l.bf16 %v273
        %v370 = vunpack.c.l.bf16 %v274
        %v371 = vunpack.c.l.bf16 %v275
        %v372 = vunpack.c.l.bf16 %v276
        %v373 = vunpack.c.l.bf16 %v277
        %v374 = vunpack.c.l.bf16 %v278
        %v375 = vunpack.c.l.bf16 %v279
        %v376 = vunpack.c.l.bf16 %v280
        %v377 = vunpack.c.l.bf16 %v281
        %v378 = vunpack.c.l.bf16 %v282
        %v379 = vunpack.c.l.bf16 %v283
        %v380 = vunpack.c.l.bf16 %v284
        %v381 = vunpack.c.l.bf16 %v285
        %v382 = vunpack.c.l.bf16 %v286
        %v383 = vunpack.c.l.bf16 %v287
        %v384 = vunpack.c.l.bf16 %v288
        %v385 = vunpack.c.l.bf16 %v289
        %v386 = vunpack.c.l.bf16 %v290
        %v387 = vunpack.c.l.bf16 %v291
        %v388 = vunpack.c.l.bf16 %v292
        %v389 = vunpack.c.l.bf16 %v293
        %v390 = vunpack.c.l.bf16 %v294
        %v391 = vunpack.c.l.bf16 %v295
        %v392 = vunpack.c.l.bf16 %v296
        %v393 = vunpack.c.l.bf16 %v297
        %v394 = vunpack.c.l.bf16 %v298
        %v395 = vunpack.c.l.bf16 %v299
        %v396 = vunpack.c.l.bf16 %v300
        %v397 = vunpack.c.l.bf16 %v301
        %v398 = vunpack.c.l.bf16 %v302
        %v399 = vunpack.c.l.bf16 %v303
        %v400 = vunpack.c.l.bf16 %v304
        %v401 = vunpack.c.l.bf16 %v305
        %v402 = vunpack.c.l.bf16 %v306
        %v403 = vunpack.c.l.bf16 %v307
        %v404 = vunpack.c.l.bf16 %v308
        %v405 = vunpack.c.l.bf16 %v309
        %v406 = vunpack.c.l.bf16 %v310
        %v407 = vunpack.c.l.bf16 %v311
        %v408 = vunpack.c.l.bf16 %v312
        %v409 = vunpack.c.l.bf16 %v313
        %v410 = vunpack.c.l.bf16 %v314
        %v411 = vunpack.c.l.bf16 %v315
        %v412 = vunpack.c.l.bf16 %v316
        %v413 = vunpack.c.l.bf16 %v317
        %v414 = vunpack.c.l.bf16 %v318
        %v415 = vunpack.c.l.bf16 %v319
        %v416 = vunpack.c.l.bf16 %v320
        %v417 = vunpack.c.l.bf16 %v321
        %v418 = vunpack.c.l.bf16 %v322
        %v419 = vld [vmem:[%s190] sm:$0xff]
        %vm420 = vcmp.ne.s32.totalorder %v419, 4294967295
        %v421 = vsel %vm420, %v419, 0
        %v422 = vmax.f32 %v323, %v324
        %v423 = vmax.f32 %v422, %v325
        %v424 = vmax.f32 %v423, %v326
        %v425 = vmax.f32 %v424, %v327
        %v426 = vmax.f32 %v425, %v328
        %v427 = vmax.f32 %v426, %v329
        %v428 = vmax.f32 %v427, %v330
        %v429 = vmax.f32 %v428, %v331
        %v430 = vmax.f32 %v429, %v332
        %v431 = vmax.f32 %v430, %v333
        %v432 = vmax.f32 %v431, %v334
        %v433 = vrot.slane %v432, 4
        %v434 = vmax.f32 %v432, %v433
        %v435 = vrot.slane %v434, 2
        %v436 = vmax.f32 %v434, %v435
        %v437 = vrot.slane %v436, 1
        %v438 = vmax.f32 %v436, %v437
        %v439 = vmax.f32 %v335, %v336
        %v440 = vmax.f32 %v439, %v337
        %v441 = vmax.f32 %v440, %v338
        %v442 = vmax.f32 %v441, %v339
        %v443 = vmax.f32 %v442, %v340
        %v444 = vmax.f32 %v443, %v341
        %v445 = vmax.f32 %v444, %v342
        %v446 = vmax.f32 %v445, %v343
        %v447 = vmax.f32 %v446, %v344
        %v448 = vmax.f32 %v447, %v345
        %v449 = vmax.f32 %v448, %v346
        %v450 = vrot.slane %v449, 4
        %v451 = vmax.f32 %v449, %v450
        %v452 = vrot.slane %v451, 2
        %v453 = vmax.f32 %v451, %v452
        %v454 = vrot.slane %v453, 1
        %v455 = vmax.f32 %v453, %v454
        %v456 = vmax.f32 %v347, %v348
        %v457 = vmax.f32 %v456, %v349
        %v458 = vmax.f32 %v457, %v350
        %v459 = vmax.f32 %v458, %v351
        %v460 = vmax.f32 %v459, %v352
        %v461 = vmax.f32 %v460, %v353
        %v462 = vmax.f32 %v461, %v354
        %v463 = vmax.f32 %v462, %v355
        %v464 = vmax.f32 %v463, %v356
        %v465 = vmax.f32 %v464, %v357
        %v466 = vmax.f32 %v465, %v358
        %v467 = vrot.slane %v466, 4
        %v468 = vmax.f32 %v466, %v467
        %v469 = vrot.slane %v468, 2
        %v470 = vmax.f32 %v468, %v469
        %v471 = vrot.slane %v470, 1
        %v472 = vmax.f32 %v470, %v471
        %v473 = vmax.f32 %v359, %v360
        %v474 = vmax.f32 %v473, %v361
        %v475 = vmax.f32 %v474, %v362
        %v476 = vmax.f32 %v475, %v363
        %v477 = vmax.f32 %v476, %v364
        %v478 = vmax.f32 %v477, %v365
        %v479 = vmax.f32 %v478, %v366
        %v480 = vmax.f32 %v479, %v367
        %v481 = vmax.f32 %v480, %v368
        %v482 = vmax.f32 %v481, %v369
        %v483 = vmax.f32 %v482, %v370
        %v484 = vrot.slane %v483, 4
        %v485 = vmax.f32 %v483, %v484
        %v486 = vrot.slane %v485, 2
        %v487 = vmax.f32 %v485, %v486
        %v488 = vrot.slane %v487, 1
        %v489 = vmax.f32 %v487, %v488
        %v490 = vmax.f32 %v371, %v372
        %v491 = vmax.f32 %v490, %v373
        %v492 = vmax.f32 %v491, %v374
        %v493 = vmax.f32 %v492, %v375
        %v494 = vmax.f32 %v493, %v376
        %v495 = vmax.f32 %v494, %v377
        %v496 = vmax.f32 %v495, %v378
        %v497 = vmax.f32 %v496, %v379
        %v498 = vmax.f32 %v497, %v380
        %v499 = vmax.f32 %v498, %v381
        %v500 = vmax.f32 %v499, %v382
        %v501 = vrot.slane %v500, 4
        %v502 = vmax.f32 %v500, %v501
        %v503 = vrot.slane %v502, 2
        %v504 = vmax.f32 %v502, %v503
        %v505 = vrot.slane %v504, 1
        %v506 = vmax.f32 %v504, %v505
        %v507 = vmax.f32 %v383, %v384
        %v508 = vmax.f32 %v507, %v385
        %v509 = vmax.f32 %v508, %v386
        %v510 = vmax.f32 %v509, %v387
        %v511 = vmax.f32 %v510, %v388
        %v512 = vmax.f32 %v511, %v389
        %v513 = vmax.f32 %v512, %v390
        %v514 = vmax.f32 %v513, %v391
        %v515 = vmax.f32 %v514, %v392
        %v516 = vmax.f32 %v515, %v393
        %v517 = vmax.f32 %v516, %v394
        %v518 = vrot.slane %v517, 4
        %v519 = vmax.f32 %v517, %v518
        %v520 = vrot.slane %v519, 2
        %v521 = vmax.f32 %v519, %v520
        %v522 = vrot.slane %v521, 1
        %v523 = vmax.f32 %v521, %v522
        %v524 = vmax.f32 %v395, %v396
        %v525 = vmax.f32 %v524, %v397
        %v526 = vmax.f32 %v525, %v398
        %v527 = vmax.f32 %v526, %v399
        %v528 = vmax.f32 %v527, %v400
        %v529 = vmax.f32 %v528, %v401
        %v530 = vmax.f32 %v529, %v402
        %v531 = vmax.f32 %v530, %v403
        %v532 = vmax.f32 %v531, %v404
        %v533 = vmax.f32 %v532, %v405
        %v534 = vmax.f32 %v533, %v406
        %v535 = vrot.slane %v534, 4
        %v536 = vmax.f32 %v534, %v535
        %v537 = vrot.slane %v536, 2
        %v538 = vmax.f32 %v536, %v537
        %v539 = vrot.slane %v538, 1
        %v540 = vmax.f32 %v538, %v539
        %v541 = vmax.f32 %v407, %v408
        %v542 = vmax.f32 %v541, %v409
        %v543 = vmax.f32 %v542, %v410
        %v544 = vmax.f32 %v543, %v411
        %v545 = vmax.f32 %v544, %v412
        %v546 = vmax.f32 %v545, %v413
        %v547 = vmax.f32 %v546, %v414
        %v548 = vmax.f32 %v547, %v415
        %v549 = vmax.f32 %v548, %v416
        %v550 = vmax.f32 %v549, %v417
        %v551 = vmax.f32 %v550, %v418
        %v552 = vrot.slane %v551, 4
        %v553 = vmax.f32 %v551, %v552
        %v554 = vrot.slane %v553, 2
        %v555 = vmax.f32 %v553, %v554
        %v556 = vrot.slane %v555, 1
        %v557 = vmax.f32 %v555, %v556
        %v558 = vsub.f32 %v323, %v438
        %v559 = vsub.f32 %v324, %v438
        %v560 = vsub.f32 %v325, %v438
        %v561 = vsub.f32 %v326, %v438
        %v562 = vsub.f32 %v327, %v438
        %v563 = vsub.f32 %v328, %v438
        %v564 = vsub.f32 %v329, %v438
        %v565 = vsub.f32 %v330, %v438
        %v566 = vsub.f32 %v331, %v438
        %v567 = vsub.f32 %v332, %v438
        %v568 = vsub.f32 %v333, %v438
        %v569 = vsub.f32 %v334, %v438
        %v570 = vsub.f32 %v335, %v455
        %v571 = vsub.f32 %v336, %v455
        %v572 = vsub.f32 %v337, %v455
        %v573 = vsub.f32 %v338, %v455
        %v574 = vsub.f32 %v339, %v455
        %v575 = vsub.f32 %v340, %v455
        %v576 = vsub.f32 %v341, %v455
        %v577 = vsub.f32 %v342, %v455
        %v578 = vsub.f32 %v343, %v455
        %v579 = vsub.f32 %v344, %v455
        %v580 = vsub.f32 %v345, %v455
        %v581 = vsub.f32 %v346, %v455
        %v582 = vsub.f32 %v347, %v472
        %v583 = vsub.f32 %v348, %v472
        %v584 = vsub.f32 %v349, %v472
        %v585 = vsub.f32 %v350, %v472
        %v586 = vsub.f32 %v351, %v472
        %v587 = vsub.f32 %v352, %v472
        %v588 = vsub.f32 %v353, %v472
        %v589 = vsub.f32 %v354, %v472
        %v590 = vsub.f32 %v355, %v472
        %v591 = vsub.f32 %v356, %v472
        %v592 = vsub.f32 %v357, %v472
        %v593 = vsub.f32 %v358, %v472
        %v594 = vsub.f32 %v359, %v489
        %v595 = vsub.f32 %v360, %v489
        %v596 = vsub.f32 %v361, %v489
        %v597 = vsub.f32 %v362, %v489
        %v598 = vsub.f32 %v363, %v489
        %v599 = vsub.f32 %v364, %v489
        %v600 = vsub.f32 %v365, %v489
        %v601 = vsub.f32 %v366, %v489
        %v602 = vsub.f32 %v367, %v489
        %v603 = vsub.f32 %v368, %v489
        %v604 = vsub.f32 %v369, %v489
        %v605 = vsub.f32 %v370, %v489
        %v606 = vsub.f32 %v371, %v506
        %v607 = vsub.f32 %v372, %v506
        %v608 = vsub.f32 %v373, %v506
        %v609 = vsub.f32 %v374, %v506
        %v610 = vsub.f32 %v375, %v506
        %v611 = vsub.f32 %v376, %v506
        %v612 = vsub.f32 %v377, %v506
        %v613 = vsub.f32 %v378, %v506
        %v614 = vsub.f32 %v379, %v506
        %v615 = vsub.f32 %v380, %v506
        %v616 = vsub.f32 %v381, %v506
        %v617 = vsub.f32 %v382, %v506
        %v618 = vsub.f32 %v383, %v523
        %v619 = vsub.f32 %v384, %v523
        %v620 = vsub.f32 %v385, %v523
        %v621 = vsub.f32 %v386, %v523
        %v622 = vsub.f32 %v387, %v523
        %v623 = vsub.f32 %v388, %v523
        %v624 = vsub.f32 %v389, %v523
        %v625 = vsub.f32 %v390, %v523
        %v626 = vsub.f32 %v391, %v523
        %v627 = vsub.f32 %v392, %v523
        %v628 = vsub.f32 %v393, %v523
        %v629 = vsub.f32 %v394, %v523
        %v630 = vsub.f32 %v395, %v540
        %v631 = vsub.f32 %v396, %v540
        %v632 = vsub.f32 %v397, %v540
        %v633 = vsub.f32 %v398, %v540
        %v634 = vsub.f32 %v399, %v540
        %v635 = vsub.f32 %v400, %v540
        %v636 = vsub.f32 %v401, %v540
        %v637 = vsub.f32 %v402, %v540
        %v638 = vsub.f32 %v403, %v540
        %v639 = vsub.f32 %v404, %v540
        %v640 = vsub.f32 %v405, %v540
        %v641 = vsub.f32 %v406, %v540
        %v642 = vsub.f32 %v407, %v557
        %v643 = vsub.f32 %v408, %v557
        %v644 = vsub.f32 %v409, %v557
        %v645 = vsub.f32 %v410, %v557
        %v646 = vsub.f32 %v411, %v557
        %v647 = vsub.f32 %v412, %v557
        %v648 = vsub.f32 %v413, %v557
        %v649 = vsub.f32 %v414, %v557
        %v650 = vsub.f32 %v415, %v557
        %v651 = vsub.f32 %v416, %v557
        %v652 = vsub.f32 %v417, %v557
        %v653 = vsub.f32 %v418, %v557
        %v654 = vmul.f32 %v558, 1.442695
        %v655 = vpow.pop %v654
        %v656 = vmul.f32 %v559, 1.442695
        %v657 = vpow.pop %v656
        %v658 = vmul.f32 %v560, 1.442695
        %v659 = vpow.pop %v658
        %v660 = vmul.f32 %v561, 1.442695
        %v661 = vpow.pop %v660
        %v662 = vmul.f32 %v562, 1.442695
        %v663 = vpow.pop %v662
        %v664 = vmul.f32 %v563, 1.442695
        %v665 = vpow.pop %v664
        %v666 = vmul.f32 %v564, 1.442695
        %v667 = vpow.pop %v666
        %v668 = vmul.f32 %v565, 1.442695
        %v669 = vpow.pop %v668
        %v670 = vmul.f32 %v566, 1.442695
        %v671 = vpow.pop %v670
        %v672 = vmul.f32 %v567, 1.442695
        %v673 = vpow.pop %v672
        %v674 = vmul.f32 %v568, 1.442695
        %v675 = vpow.pop %v674
        %v676 = vmul.f32 %v569, 1.442695
        %v677 = vpow.pop %v676
        %v678 = vmul.f32 %v570, 1.442695
        %v679 = vpow.pop %v678
        %v680 = vmul.f32 %v571, 1.442695
        %v681 = vpow.pop %v680
        %v682 = vmul.f32 %v572, 1.442695
        %v683 = vpow.pop %v682
        %v684 = vmul.f32 %v573, 1.442695
        %v685 = vpow.pop %v684
        %v686 = vmul.f32 %v574, 1.442695
        %v687 = vpow.pop %v686
        %v688 = vmul.f32 %v575, 1.442695
        %v689 = vpow.pop %v688
        %v690 = vmul.f32 %v576, 1.442695
        %v691 = vpow.pop %v690
        %v692 = vmul.f32 %v577, 1.442695
        %v693 = vpow.pop %v692
        %v694 = vmul.f32 %v578, 1.442695
        %v695 = vpow.pop %v694
        %v696 = vmul.f32 %v579, 1.442695
        %v697 = vpow.pop %v696
        %v698 = vmul.f32 %v580, 1.442695
        %v699 = vpow.pop %v698
        %v700 = vmul.f32 %v581, 1.442695
        %v701 = vpow.pop %v700
        %v702 = vmul.f32 %v582, 1.442695
        %v703 = vpow.pop %v702
        %v704 = vmul.f32 %v583, 1.442695
        %v705 = vpow.pop %v704
        %v706 = vmul.f32 %v584, 1.442695
        %v707 = vpow.pop %v706
        %v708 = vmul.f32 %v585, 1.442695
        %v709 = vpow.pop %v708
        %v710 = vmul.f32 %v586, 1.442695
        %v711 = vpow.pop %v710
        %v712 = vmul.f32 %v587, 1.442695
        %v713 = vpow.pop %v712
        %v714 = vmul.f32 %v588, 1.442695
        %v715 = vpow.pop %v714
        %v716 = vmul.f32 %v589, 1.442695
        %v717 = vpow.pop %v716
        %v718 = vmul.f32 %v590, 1.442695
        %v719 = vpow.pop %v718
        %v720 = vmul.f32 %v591, 1.442695
        %v721 = vpow.pop %v720
        %v722 = vmul.f32 %v592, 1.442695
        %v723 = vpow.pop %v722
        %v724 = vmul.f32 %v593, 1.442695
        %v725 = vpow.pop %v724
        %v726 = vmul.f32 %v594, 1.442695
        %v727 = vpow.pop %v726
        %v728 = vmul.f32 %v595, 1.442695
        %v729 = vpow.pop %v728
        %v730 = vmul.f32 %v596, 1.442695
        %v731 = vpow.pop %v730
        %v732 = vmul.f32 %v597, 1.442695
        %v733 = vpow.pop %v732
        %v734 = vmul.f32 %v598, 1.442695
        %v735 = vpow.pop %v734
        %v736 = vmul.f32 %v599, 1.442695
        %v737 = vpow.pop %v736
        %v738 = vmul.f32 %v600, 1.442695
        %v739 = vpow.pop %v738
        %v740 = vmul.f32 %v601, 1.442695
        %v741 = vpow.pop %v740
        %v742 = vmul.f32 %v602, 1.442695
        %v743 = vpow.pop %v742
        %v744 = vmul.f32 %v603, 1.442695
        %v745 = vpow.pop %v744
        %v746 = vmul.f32 %v604, 1.442695
        %v747 = vpow.pop %v746
        %v748 = vmul.f32 %v605, 1.442695
        %v749 = vpow.pop %v748
        %v750 = vmul.f32 %v606, 1.442695
        %v751 = vpow.pop %v750
        %v752 = vmul.f32 %v607, 1.442695
        %v753 = vpow.pop %v752
        %v754 = vmul.f32 %v608, 1.442695
        %v755 = vpow.pop %v754
        %v756 = vmul.f32 %v609, 1.442695
        %v757 = vpow.pop %v756
        %v758 = vmul.f32 %v610, 1.442695
        %v759 = vpow.pop %v758
        %v760 = vmul.f32 %v611, 1.442695
        %v761 = vpow.pop %v760
        %v762 = vmul.f32 %v612, 1.442695
        %v763 = vpow.pop %v762
        %v764 = vmul.f32 %v613, 1.442695
        %v765 = vpow.pop %v764
        %v766 = vmul.f32 %v614, 1.442695
        %v767 = vpow.pop %v766
        %v768 = vmul.f32 %v615, 1.442695
        %v769 = vpow.pop %v768
        %v770 = vmul.f32 %v616, 1.442695
        %v771 = vpow.pop %v770
        %v772 = vmul.f32 %v617, 1.442695
        %v773 = vpow.pop %v772
        %v774 = vmul.f32 %v618, 1.442695
        %v775 = vpow.pop %v774
        %v776 = vmul.f32 %v619, 1.442695
        %v777 = vpow.pop %v776
        %v778 = vmul.f32 %v620, 1.442695
        %v779 = vpow.pop %v778
        %v780 = vmul.f32 %v621, 1.442695
        %v781 = vpow.pop %v780
        %v782 = vmul.f32 %v622, 1.442695
        %v783 = vpow.pop %v782
        %v784 = vmul.f32 %v623, 1.442695
        %v785 = vpow.pop %v784
        %v786 = vmul.f32 %v624, 1.442695
        %v787 = vpow.pop %v786
        %v788 = vmul.f32 %v625, 1.442695
        %v789 = vpow.pop %v788
        %v790 = vmul.f32 %v626, 1.442695
        %v791 = vpow.pop %v790
        %v792 = vmul.f32 %v627, 1.442695
        %v793 = vpow.pop %v792
        %v794 = vmul.f32 %v628, 1.442695
        %v795 = vpow.pop %v794
        %v796 = vmul.f32 %v629, 1.442695
        %v797 = vpow.pop %v796
        %v798 = vmul.f32 %v630, 1.442695
        %v799 = vpow.pop %v798
        %v800 = vmul.f32 %v631, 1.442695
        %v801 = vpow.pop %v800
        %v802 = vmul.f32 %v632, 1.442695
        %v803 = vpow.pop %v802
        %v804 = vmul.f32 %v633, 1.442695
        %v805 = vpow.pop %v804
        %v806 = vmul.f32 %v634, 1.442695
        %v807 = vpow.pop %v806
        %v808 = vmul.f32 %v635, 1.442695
        %v809 = vpow.pop %v808
        %v810 = vmul.f32 %v636, 1.442695
        %v811 = vpow.pop %v810
        %v812 = vmul.f32 %v637, 1.442695
        %v813 = vpow.pop %v812
        %v814 = vmul.f32 %v638, 1.442695
        %v815 = vpow.pop %v814
        %v816 = vmul.f32 %v639, 1.442695
        %v817 = vpow.pop %v816
        %v818 = vmul.f32 %v640, 1.442695
        %v819 = vpow.pop %v818
        %v820 = vmul.f32 %v641, 1.442695
        %v821 = vpow.pop %v820
        %v822 = vmul.f32 %v642, 1.442695
        %v823 = vpow.pop %v822
        %v824 = vmul.f32 %v643, 1.442695
        %v825 = vpow.pop %v824
        %v826 = vmul.f32 %v644, 1.442695
        %v827 = vpow.pop %v826
        %v828 = vmul.f32 %v645, 1.442695
        %v829 = vpow.pop %v828
        %v830 = vmul.f32 %v646, 1.442695
        %v831 = vpow.pop %v830
        %v832 = vmul.f32 %v647, 1.442695
        %v833 = vpow.pop %v832
        %v834 = vmul.f32 %v648, 1.442695
        %v835 = vpow.pop %v834
        %v836 = vmul.f32 %v649, 1.442695
        %v837 = vpow.pop %v836
        %v838 = vmul.f32 %v650, 1.442695
        %v839 = vpow.pop %v838
        %v840 = vmul.f32 %v651, 1.442695
        %v841 = vpow.pop %v840
        %v842 = vmul.f32 %v652, 1.442695
        %v843 = vpow.pop %v842
        %v844 = vmul.f32 %v653, 1.442695
        %v845 = vpow.pop %v844
        %v846 = vadd.f32 %v655, %v657
        %v847 = vadd.f32 %v846, %v659
        %v848 = vadd.f32 %v847, %v661
        %v849 = vadd.f32 %v848, %v663
        %v850 = vadd.f32 %v849, %v665
        %v851 = vadd.f32 %v850, %v667
        %v852 = vadd.f32 %v851, %v669
        %v853 = vadd.f32 %v852, %v671
        %v854 = vadd.f32 %v853, %v673
        %v855 = vadd.f32 %v854, %v675
        %v856 = vadd.f32 %v855, %v677
        %v857 = vrot.slane %v856, 4
        %v858 = vadd.f32 %v856, %v857
        %v859 = vrot.slane %v858, 2
        %v860 = vadd.f32 %v858, %v859
        %v861 = vrot.slane %v860, 1
        %v862 = vadd.f32 %v860, %v861
        %v863 = vadd.f32 %v679, %v681
        %v864 = vadd.f32 %v863, %v683
        %v865 = vadd.f32 %v864, %v685
        %v866 = vadd.f32 %v865, %v687
        %v867 = vadd.f32 %v866, %v689
        %v868 = vadd.f32 %v867, %v691
        %v869 = vadd.f32 %v868, %v693
        %v870 = vadd.f32 %v869, %v695
        %v871 = vadd.f32 %v870, %v697
        %v872 = vadd.f32 %v871, %v699
        %v873 = vadd.f32 %v872, %v701
        %v874 = vrot.slane %v873, 4
        %v875 = vadd.f32 %v873, %v874
        %v876 = vrot.slane %v875, 2
        %v877 = vadd.f32 %v875, %v876
        %v878 = vrot.slane %v877, 1
        %v879 = vadd.f32 %v877, %v878
        %v880 = vadd.f32 %v703, %v705
        %v881 = vadd.f32 %v880, %v707
        %v882 = vadd.f32 %v881, %v709
        %v883 = vadd.f32 %v882, %v711
        %v884 = vadd.f32 %v883, %v713
        %v885 = vadd.f32 %v884, %v715
        %v886 = vadd.f32 %v885, %v717
        %v887 = vadd.f32 %v886, %v719
        %v888 = vadd.f32 %v887, %v721
        %v889 = vadd.f32 %v888, %v723
        %v890 = vadd.f32 %v889, %v725
        %v891 = vrot.slane %v890, 4
        %v892 = vadd.f32 %v890, %v891
        %v893 = vrot.slane %v892, 2
        %v894 = vadd.f32 %v892, %v893
        %v895 = vrot.slane %v894, 1
        %v896 = vadd.f32 %v894, %v895
        %v897 = vadd.f32 %v727, %v729
        %v898 = vadd.f32 %v897, %v731
        %v899 = vadd.f32 %v898, %v733
        %v900 = vadd.f32 %v899, %v735
        %v901 = vadd.f32 %v900, %v737
        %v902 = vadd.f32 %v901, %v739
        %v903 = vadd.f32 %v902, %v741
        %v904 = vadd.f32 %v903, %v743
        %v905 = vadd.f32 %v904, %v745
        %v906 = vadd.f32 %v905, %v747
        %v907 = vadd.f32 %v906, %v749
        %v908 = vrot.slane %v907, 4
        %v909 = vadd.f32 %v907, %v908
        %v910 = vrot.slane %v909, 2
        %v911 = vadd.f32 %v909, %v910
        %v912 = vrot.slane %v911, 1
        %v913 = vadd.f32 %v911, %v912
        %v914 = vadd.f32 %v751, %v753
        %v915 = vadd.f32 %v914, %v755
        %v916 = vadd.f32 %v915, %v757
        %v917 = vadd.f32 %v916, %v759
        %v918 = vadd.f32 %v917, %v761
        %v919 = vadd.f32 %v918, %v763
        %v920 = vadd.f32 %v919, %v765
        %v921 = vadd.f32 %v920, %v767
        %v922 = vadd.f32 %v921, %v769
        %v923 = vadd.f32 %v922, %v771
        %v924 = vadd.f32 %v923, %v773
        %v925 = vrot.slane %v924, 4
        %v926 = vadd.f32 %v924, %v925
        %v927 = vrot.slane %v926, 2
        %v928 = vadd.f32 %v926, %v927
        %v929 = vrot.slane %v928, 1
        %v930 = vadd.f32 %v928, %v929
        %v931 = vadd.f32 %v775, %v777
        %v932 = vadd.f32 %v931, %v779
        %v933 = vadd.f32 %v932, %v781
        %v934 = vadd.f32 %v933, %v783
        %v935 = vadd.f32 %v934, %v785
        %v936 = vadd.f32 %v935, %v787
        %v937 = vadd.f32 %v936, %v789
        %v938 = vadd.f32 %v937, %v791
        %v939 = vadd.f32 %v938, %v793
        %v940 = vadd.f32 %v939, %v795
        %v941 = vadd.f32 %v940, %v797
        %v942 = vrot.slane %v941, 4
        %v943 = vadd.f32 %v941, %v942
        %v944 = vrot.slane %v943, 2
        %v945 = vadd.f32 %v943, %v944
        %v946 = vrot.slane %v945, 1
        %v947 = vadd.f32 %v945, %v946
        %v948 = vadd.f32 %v799, %v801
        %v949 = vadd.f32 %v948, %v803
        %v950 = vadd.f32 %v949, %v805
        %v951 = vadd.f32 %v950, %v807
        %v952 = vadd.f32 %v951, %v809
        %v953 = vadd.f32 %v952, %v811
        %v954 = vadd.f32 %v953, %v813
        %v955 = vadd.f32 %v954, %v815
        %v956 = vadd.f32 %v955, %v817
        %v957 = vadd.f32 %v956, %v819
        %v958 = vadd.f32 %v957, %v821
        %v959 = vrot.slane %v958, 4
        %v960 = vadd.f32 %v958, %v959
        %v961 = vrot.slane %v960, 2
        %v962 = vadd.f32 %v960, %v961
        %v963 = vrot.slane %v962, 1
        %v964 = vadd.f32 %v962, %v963
        %v965 = vadd.f32 %v823, %v825
        %v966 = vadd.f32 %v965, %v827
        %v967 = vadd.f32 %v966, %v829
        %v968 = vadd.f32 %v967, %v831
        %v969 = vadd.f32 %v968, %v833
        %v970 = vadd.f32 %v969, %v835
        %v971 = vadd.f32 %v970, %v837
        %v972 = vadd.f32 %v971, %v839
        %v973 = vadd.f32 %v972, %v841
        %v974 = vadd.f32 %v973, %v843
        %v975 = vadd.f32 %v974, %v845
        %v976 = vrot.slane %v975, 4
        %v977 = vadd.f32 %v975, %v976
        %v978 = vrot.slane %v977, 2
        %v979 = vadd.f32 %v977, %v978
        %v980 = vrot.slane %v979, 1
        %v981 = vadd.f32 %v979, %v980
        %v982 = vlog2.pop %v862
        %v983 = vmul.f32 %v982, 0.6931472
        %v984 = vlog2.pop %v879
        %v985 = vmul.f32 %v984, 0.6931472
        %v986 = vlog2.pop %v896
        %v987 = vmul.f32 %v986, 0.6931472
        %v988 = vlog2.pop %v913
        %v989 = vmul.f32 %v988, 0.6931472
        %v990 = vlog2.pop %v930
        %v991 = vmul.f32 %v990, 0.6931472
        %v992 = vlog2.pop %v947
        %v993 = vmul.f32 %v992, 0.6931472
        %v994 = vlog2.pop %v964
        %v995 = vmul.f32 %v994, 0.6931472
        %v996 = vlog2.pop %v981
        %v997 = vmul.f32 %v996, 0.6931472
        %v998 = vadd.f32 %v983, %v438
        %v999 = vadd.f32 %v985, %v455
        %v1000 = vadd.f32 %v987, %v472
        %v1001 = vadd.f32 %v989, %v489
        %v1002 = vadd.f32 %v991, %v506
        %v1003 = vadd.f32 %v993, %v523
        %v1004 = vadd.f32 %v995, %v540
        %v1005 = vadd.f32 %v997, %v557
        %v1006 = vlaneseq
        %v1007 = vshrl.u32 %v1006, 7
        %v1008 = vadd.s32 %v1007, 8
        %v1009 = vadd.s32 %v1007, 16
        %v1010 = vadd.s32 %v1007, 24
        %v1011 = vadd.s32 %v1007, 32
        %v1012 = vadd.s32 %v1007, 40
        %v1013 = vadd.s32 %v1007, 48
        %v1014 = vadd.s32 %v1007, 56
        %v1015 = vadd.s32 %v1007, 64
        %v1016 = vadd.s32 %v1007, 72
        %v1017 = vadd.s32 %v1007, 80
        %v1018 = vadd.s32 %v1007, 88
        %v1019 = vcombine.high %v421, %v421
        %v1021 = vunpack.c.l.s4 1966171168
        %v1022 = vunpack.c.0.s8 %v1021
        %v1023 = vlaneseq
        %v1024 = vshrl.u32 %v1023, 7
        %v1025 = vsub.s32 %v1022, %v1024
        %v1026 = vrot.slane %v421, %v1025
        %v1028 = vunpack.c.l.s4 1966171168
        %v1029 = vunpack.c.0.s8 %v1028
        %v1030 = vlaneseq
        %v1031 = vshrl.u32 %v1030, 7
        %v1032 = vsub.s32 %v1029, %v1031
        %v1033 = vrot.slane %v1019, %v1032
        %v1034 = vcombine.high %v1026, %v1026
        %v1035 = vcombine.high %v1033, %v1033
        %v1037 = vunpack.c.l.s4 1966171168
        %v1038 = vunpack.c.0.s8 %v1037
        %v1039 = vlaneseq
        %v1040 = vshrl.u32 %v1039, 7
        %v1041 = vsub.s32 %v1038, %v1040
        %v1042 = vrot.slane %v1026, %v1041
        %v1044 = vunpack.c.l.s4 1966171168
        %v1045 = vunpack.c.0.s8 %v1044
        %v1046 = vlaneseq
        %v1047 = vshrl.u32 %v1046, 7
        %v1048 = vsub.s32 %v1045, %v1047
        %v1049 = vrot.slane %v1033, %v1048
        %v1051 = vunpack.c.l.s4 1966171168
        %v1052 = vunpack.c.0.s8 %v1051
        %v1053 = vlaneseq
        %v1054 = vshrl.u32 %v1053, 7
        %v1055 = vsub.s32 %v1052, %v1054
        %v1056 = vrot.slane %v1034, %v1055
        %v1058 = vunpack.c.l.s4 1966171168
        %v1059 = vunpack.c.0.s8 %v1058
        %v1060 = vlaneseq
        %v1061 = vshrl.u32 %v1060, 7
        %v1062 = vsub.s32 %v1059, %v1061
        %v1063 = vrot.slane %v1035, %v1062
        %v1064 = vcombine.high %v1042, %v1042
        %v1065 = vcombine.high %v1049, %v1049
        %v1066 = vcombine.high %v1056, %v1056
        %v1067 = vcombine.high %v1063, %v1063
        %v1068 = vlaneseq
        %v1069 = vshrl.u32 %v1068, 7
        %v1070 = vsub.s32 0, %v1069
        %v1071 = vrot.slane %v1042, %v1070
        %v1072 = vlaneseq
        %v1073 = vshrl.u32 %v1072, 7
        %v1074 = vsub.s32 0, %v1073
        %v1075 = vrot.slane %v1056, %v1074
        %v1076 = vlaneseq
        %v1077 = vshrl.u32 %v1076, 7
        %v1078 = vsub.s32 0, %v1077
        %v1079 = vrot.slane %v1064, %v1078
        %v1080 = vlaneseq
        %v1081 = vshrl.u32 %v1080, 7
        %v1082 = vsub.s32 0, %v1081
        %v1083 = vrot.slane %v1066, %v1082
        %v1084 = vlaneseq
        %v1085 = vshrl.u32 %v1084, 7
        %v1086 = vsub.s32 0, %v1085
        %v1087 = vrot.slane %v1049, %v1086
        %v1088 = vlaneseq
        %v1089 = vshrl.u32 %v1088, 7
        %v1090 = vsub.s32 0, %v1089
        %v1091 = vrot.slane %v1063, %v1090
        %v1092 = vlaneseq
        %v1093 = vshrl.u32 %v1092, 7
        %v1094 = vsub.s32 0, %v1093
        %v1095 = vrot.slane %v1065, %v1094
        %v1096 = vlaneseq
        %v1097 = vshrl.u32 %v1096, 7
        %v1098 = vsub.s32 0, %v1097
        %v1099 = vrot.slane %v1067, %v1098
        %vm1100 = vcmp.eq.s32.totalorder %v1007, %v1071
        %vm1101 = vcmp.eq.s32.totalorder %v1008, %v1071
        %vm1102 = vcmp.eq.s32.totalorder %v1009, %v1071
        %vm1103 = vcmp.eq.s32.totalorder %v1010, %v1071
        %vm1104 = vcmp.eq.s32.totalorder %v1011, %v1071
        %vm1105 = vcmp.eq.s32.totalorder %v1012, %v1071
        %vm1106 = vcmp.eq.s32.totalorder %v1013, %v1071
        %vm1107 = vcmp.eq.s32.totalorder %v1014, %v1071
        %vm1108 = vcmp.eq.s32.totalorder %v1015, %v1071
        %vm1109 = vcmp.eq.s32.totalorder %v1016, %v1071
        %vm1110 = vcmp.eq.s32.totalorder %v1017, %v1071
        %vm1111 = vcmp.eq.s32.totalorder %v1018, %v1071
        %vm1112 = vcmp.eq.s32.totalorder %v1007, %v1075
        %vm1113 = vcmp.eq.s32.totalorder %v1008, %v1075
        %vm1114 = vcmp.eq.s32.totalorder %v1009, %v1075
        %vm1115 = vcmp.eq.s32.totalorder %v1010, %v1075
        %vm1116 = vcmp.eq.s32.totalorder %v1011, %v1075
        %vm1117 = vcmp.eq.s32.totalorder %v1012, %v1075
        %vm1118 = vcmp.eq.s32.totalorder %v1013, %v1075
        %vm1119 = vcmp.eq.s32.totalorder %v1014, %v1075
        %vm1120 = vcmp.eq.s32.totalorder %v1015, %v1075
        %vm1121 = vcmp.eq.s32.totalorder %v1016, %v1075
        %vm1122 = vcmp.eq.s32.totalorder %v1017, %v1075
        %vm1123 = vcmp.eq.s32.totalorder %v1018, %v1075
        %vm1124 = vcmp.eq.s32.totalorder %v1007, %v1079
        %vm1125 = vcmp.eq.s32.totalorder %v1008, %v1079
        %vm1126 = vcmp.eq.s32.totalorder %v1009, %v1079
        %vm1127 = vcmp.eq.s32.totalorder %v1010, %v1079
        %vm1128 = vcmp.eq.s32.totalorder %v1011, %v1079
        %vm1129 = vcmp.eq.s32.totalorder %v1012, %v1079
        %vm1130 = vcmp.eq.s32.totalorder %v1013, %v1079
        %vm1131 = vcmp.eq.s32.totalorder %v1014, %v1079
        %vm1132 = vcmp.eq.s32.totalorder %v1015, %v1079
        %vm1133 = vcmp.eq.s32.totalorder %v1016, %v1079
        %vm1134 = vcmp.eq.s32.totalorder %v1017, %v1079
        %vm1135 = vcmp.eq.s32.totalorder %v1018, %v1079
        %vm1136 = vcmp.eq.s32.totalorder %v1007, %v1083
        %vm1137 = vcmp.eq.s32.totalorder %v1008, %v1083
        %vm1138 = vcmp.eq.s32.totalorder %v1009, %v1083
        %vm1139 = vcmp.eq.s32.totalorder %v1010, %v1083
        %vm1140 = vcmp.eq.s32.totalorder %v1011, %v1083
        %vm1141 = vcmp.eq.s32.totalorder %v1012, %v1083
        %vm1142 = vcmp.eq.s32.totalorder %v1013, %v1083
        %vm1143 = vcmp.eq.s32.totalorder %v1014, %v1083
        %vm1144 = vcmp.eq.s32.totalorder %v1015, %v1083
        %vm1145 = vcmp.eq.s32.totalorder %v1016, %v1083
        %vm1146 = vcmp.eq.s32.totalorder %v1017, %v1083
        %vm1147 = vcmp.eq.s32.totalorder %v1018, %v1083
        %vm1148 = vcmp.eq.s32.totalorder %v1007, %v1087
        %vm1149 = vcmp.eq.s32.totalorder %v1008, %v1087
        %vm1150 = vcmp.eq.s32.totalorder %v1009, %v1087
        %vm1151 = vcmp.eq.s32.totalorder %v1010, %v1087
        %vm1152 = vcmp.eq.s32.totalorder %v1011, %v1087
        %vm1153 = vcmp.eq.s32.totalorder %v1012, %v1087
        %vm1154 = vcmp.eq.s32.totalorder %v1013, %v1087
        %vm1155 = vcmp.eq.s32.totalorder %v1014, %v1087
        %vm1156 = vcmp.eq.s32.totalorder %v1015, %v1087
        %vm1157 = vcmp.eq.s32.totalorder %v1016, %v1087
        %vm1158 = vcmp.eq.s32.totalorder %v1017, %v1087
        %vm1159 = vcmp.eq.s32.totalorder %v1018, %v1087
        %vm1160 = vcmp.eq.s32.totalorder %v1007, %v1091
        %vm1161 = vcmp.eq.s32.totalorder %v1008, %v1091
        %vm1162 = vcmp.eq.s32.totalorder %v1009, %v1091
        %vm1163 = vcmp.eq.s32.totalorder %v1010, %v1091
        %vm1164 = vcmp.eq.s32.totalorder %v1011, %v1091
        %vm1165 = vcmp.eq.s32.totalorder %v1012, %v1091
        %vm1166 = vcmp.eq.s32.totalorder %v1013, %v1091
        %vm1167 = vcmp.eq.s32.totalorder %v1014, %v1091
        %vm1168 = vcmp.eq.s32.totalorder %v1015, %v1091
        %vm1169 = vcmp.eq.s32.totalorder %v1016, %v1091
        %vm1170 = vcmp.eq.s32.totalorder %v1017, %v1091
        %vm1171 = vcmp.eq.s32.totalorder %v1018, %v1091
        %vm1172 = vcmp.eq.s32.totalorder %v1007, %v1095
        %vm1173 = vcmp.eq.s32.totalorder %v1008, %v1095
        %vm1174 = vcmp.eq.s32.totalorder %v1009, %v1095
        %vm1175 = vcmp.eq.s32.totalorder %v1010, %v1095
        %vm1176 = vcmp.eq.s32.totalorder %v1011, %v1095
        %vm1177 = vcmp.eq.s32.totalorder %v1012, %v1095
        %vm1178 = vcmp.eq.s32.totalorder %v1013, %v1095
        %vm1179 = vcmp.eq.s32.totalorder %v1014, %v1095
        %vm1180 = vcmp.eq.s32.totalorder %v1015, %v1095
        %vm1181 = vcmp.eq.s32.totalorder %v1016, %v1095
        %vm1182 = vcmp.eq.s32.totalorder %v1017, %v1095
        %vm1183 = vcmp.eq.s32.totalorder %v1018, %v1095
        %vm1184 = vcmp.eq.s32.totalorder %v1007, %v1099
        %vm1185 = vcmp.eq.s32.totalorder %v1008, %v1099
        %vm1186 = vcmp.eq.s32.totalorder %v1009, %v1099
        %vm1187 = vcmp.eq.s32.totalorder %v1010, %v1099
        %vm1188 = vcmp.eq.s32.totalorder %v1011, %v1099
        %vm1189 = vcmp.eq.s32.totalorder %v1012, %v1099
        %vm1190 = vcmp.eq.s32.totalorder %v1013, %v1099
        %vm1191 = vcmp.eq.s32.totalorder %v1014, %v1099
        %vm1192 = vcmp.eq.s32.totalorder %v1015, %v1099
        %vm1193 = vcmp.eq.s32.totalorder %v1016, %v1099
        %vm1194 = vcmp.eq.s32.totalorder %v1017, %v1099
        %vm1195 = vcmp.eq.s32.totalorder %v1018, %v1099
        %v1196 = vsel %vm1100, %v323, 0.0
        %v1197 = vsel %vm1101, %v324, 0.0
        %v1198 = vsel %vm1102, %v325, 0.0
        %v1199 = vsel %vm1103, %v326, 0.0
        %v1200 = vsel %vm1104, %v327, 0.0
        %v1201 = vsel %vm1105, %v328, 0.0
        %v1202 = vsel %vm1106, %v329, 0.0
        %v1203 = vsel %vm1107, %v330, 0.0
        %v1204 = vsel %vm1108, %v331, 0.0
        %v1205 = vsel %vm1109, %v332, 0.0
        %v1206 = vsel %vm1110, %v333, 0.0
        %v1207 = vsel %vm1111, %v334, 0.0
        %v1208 = vsel %vm1112, %v335, 0.0
        %v1209 = vsel %vm1113, %v336, 0.0
        %v1210 = vsel %vm1114, %v337, 0.0
        %v1211 = vsel %vm1115, %v338, 0.0
        %v1212 = vsel %vm1116, %v339, 0.0
        %v1213 = vsel %vm1117, %v340, 0.0
        %v1214 = vsel %vm1118, %v341, 0.0
        %v1215 = vsel %vm1119, %v342, 0.0
        %v1216 = vsel %vm1120, %v343, 0.0
        %v1217 = vsel %vm1121, %v344, 0.0
        %v1218 = vsel %vm1122, %v345, 0.0
        %v1219 = vsel %vm1123, %v346, 0.0
        %v1220 = vsel %vm1124, %v347, 0.0
        %v1221 = vsel %vm1125, %v348, 0.0
        %v1222 = vsel %vm1126, %v349, 0.0
        %v1223 = vsel %vm1127, %v350, 0.0
        %v1224 = vsel %vm1128, %v351, 0.0
        %v1225 = vsel %vm1129, %v352, 0.0
        %v1226 = vsel %vm1130, %v353, 0.0
        %v1227 = vsel %vm1131, %v354, 0.0
        %v1228 = vsel %vm1132, %v355, 0.0
        %v1229 = vsel %vm1133, %v356, 0.0
        %v1230 = vsel %vm1134, %v357, 0.0
        %v1231 = vsel %vm1135, %v358, 0.0
        %v1232 = vsel %vm1136, %v359, 0.0
        %v1233 = vsel %vm1137, %v360, 0.0
        %v1234 = vsel %vm1138, %v361, 0.0
        %v1235 = vsel %vm1139, %v362, 0.0
        %v1236 = vsel %vm1140, %v363, 0.0
        %v1237 = vsel %vm1141, %v364, 0.0
        %v1238 = vsel %vm1142, %v365, 0.0
        %v1239 = vsel %vm1143, %v366, 0.0
        %v1240 = vsel %vm1144, %v367, 0.0
        %v1241 = vsel %vm1145, %v368, 0.0
        %v1242 = vsel %vm1146, %v369, 0.0
        %v1243 = vsel %vm1147, %v370, 0.0
        %v1244 = vsel %vm1148, %v371, 0.0
        %v1245 = vsel %vm1149, %v372, 0.0
        %v1246 = vsel %vm1150, %v373, 0.0
        %v1247 = vsel %vm1151, %v374, 0.0
        %v1248 = vsel %vm1152, %v375, 0.0
        %v1249 = vsel %vm1153, %v376, 0.0
        %v1250 = vsel %vm1154, %v377, 0.0
        %v1251 = vsel %vm1155, %v378, 0.0
        %v1252 = vsel %vm1156, %v379, 0.0
        %v1253 = vsel %vm1157, %v380, 0.0
        %v1254 = vsel %vm1158, %v381, 0.0
        %v1255 = vsel %vm1159, %v382, 0.0
        %v1256 = vsel %vm1160, %v383, 0.0
        %v1257 = vsel %vm1161, %v384, 0.0
        %v1258 = vsel %vm1162, %v385, 0.0
        %v1259 = vsel %vm1163, %v386, 0.0
        %v1260 = vsel %vm1164, %v387, 0.0
        %v1261 = vsel %vm1165, %v388, 0.0
        %v1262 = vsel %vm1166, %v389, 0.0
        %v1263 = vsel %vm1167, %v390, 0.0
        %v1264 = vsel %vm1168, %v391, 0.0
        %v1265 = vsel %vm1169, %v392, 0.0
        %v1266 = vsel %vm1170, %v393, 0.0
        %v1267 = vsel %vm1171, %v394, 0.0
        %v1268 = vsel %vm1172, %v395, 0.0
        %v1269 = vsel %vm1173, %v396, 0.0
        %v1270 = vsel %vm1174, %v397, 0.0
        %v1271 = vsel %vm1175, %v398, 0.0
        %v1272 = vsel %vm1176, %v399, 0.0
        %v1273 = vsel %vm1177, %v400, 0.0
        %v1274 = vsel %vm1178, %v401, 0.0
        %v1275 = vsel %vm1179, %v402, 0.0
        %v1276 = vsel %vm1180, %v403, 0.0
        %v1277 = vsel %vm1181, %v404, 0.0
        %v1278 = vsel %vm1182, %v405, 0.0
        %v1279 = vsel %vm1183, %v406, 0.0
        %v1280 = vsel %vm1184, %v407, 0.0
        %v1281 = vsel %vm1185, %v408, 0.0
        %v1282 = vsel %vm1186, %v409, 0.0
        %v1283 = vsel %vm1187, %v410, 0.0
        %v1284 = vsel %vm1188, %v411, 0.0
        %v1285 = vsel %vm1189, %v412, 0.0
        %v1286 = vsel %vm1190, %v413, 0.0
        %v1287 = vsel %vm1191, %v414, 0.0
        %v1288 = vsel %vm1192, %v415, 0.0
        %v1289 = vsel %vm1193, %v416, 0.0
        %v1290 = vsel %vm1194, %v417, 0.0
        %v1291 = vsel %vm1195, %v418, 0.0
        %v1292 = vadd.f32 %v1196, %v1197
        %v1293 = vadd.f32 %v1292, %v1198
        %v1294 = vadd.f32 %v1293, %v1199
        %v1295 = vadd.f32 %v1294, %v1200
        %v1296 = vadd.f32 %v1295, %v1201
        %v1297 = vadd.f32 %v1296, %v1202
        %v1298 = vadd.f32 %v1297, %v1203
        %v1299 = vadd.f32 %v1298, %v1204
        %v1300 = vadd.f32 %v1299, %v1205
        %v1301 = vadd.f32 %v1300, %v1206
        %v1302 = vadd.f32 %v1301, %v1207
        %v1303 = vrot.slane %v1302, 4
        %v1304 = vadd.f32 %v1302, %v1303
        %v1305 = vrot.slane %v1304, 2
        %v1306 = vadd.f32 %v1304, %v1305
        %v1307 = vrot.slane %v1306, 1
        %v1308 = vadd.f32 %v1306, %v1307
        %v1309 = vadd.f32 %v1208, %v1209
        %v1310 = vadd.f32 %v1309, %v1210
        %v1311 = vadd.f32 %v1310, %v1211
        %v1312 = vadd.f32 %v1311, %v1212
        %v1313 = vadd.f32 %v1312, %v1213
        %v1314 = vadd.f32 %v1313, %v1214
        %v1315 = vadd.f32 %v1314, %v1215
        %v1316 = vadd.f32 %v1315, %v1216
        %v1317 = vadd.f32 %v1316, %v1217
        %v1318 = vadd.f32 %v1317, %v1218
        %v1319 = vadd.f32 %v1318, %v1219
        %v1320 = vrot.slane %v1319, 4
        %v1321 = vadd.f32 %v1319, %v1320
        %v1322 = vrot.slane %v1321, 2
        %v1323 = vadd.f32 %v1321, %v1322
        %v1324 = vrot.slane %v1323, 1
        %v1325 = vadd.f32 %v1323, %v1324
        %v1326 = vadd.f32 %v1220, %v1221
        %v1327 = vadd.f32 %v1326, %v1222
        %v1328 = vadd.f32 %v1327, %v1223
        %v1329 = vadd.f32 %v1328, %v1224
        %v1330 = vadd.f32 %v1329, %v1225
        %v1331 = vadd.f32 %v1330, %v1226
        %v1332 = vadd.f32 %v1331, %v1227
        %v1333 = vadd.f32 %v1332, %v1228
        %v1334 = vadd.f32 %v1333, %v1229
        %v1335 = vadd.f32 %v1334, %v1230
        %v1336 = vadd.f32 %v1335, %v1231
        %v1337 = vrot.slane %v1336, 4
        %v1338 = vadd.f32 %v1336, %v1337
        %v1339 = vrot.slane %v1338, 2
        %v1340 = vadd.f32 %v1338, %v1339
        %v1341 = vrot.slane %v1340, 1
        %v1342 = vadd.f32 %v1340, %v1341
        %v1343 = vadd.f32 %v1232, %v1233
        %v1344 = vadd.f32 %v1343, %v1234
        %v1345 = vadd.f32 %v1344, %v1235
        %v1346 = vadd.f32 %v1345, %v1236
        %v1347 = vadd.f32 %v1346, %v1237
        %v1348 = vadd.f32 %v1347, %v1238
        %v1349 = vadd.f32 %v1348, %v1239
        %v1350 = vadd.f32 %v1349, %v1240
        %v1351 = vadd.f32 %v1350, %v1241
        %v1352 = vadd.f32 %v1351, %v1242
        %v1353 = vadd.f32 %v1352, %v1243
        %v1354 = vrot.slane %v1353, 4
        %v1355 = vadd.f32 %v1353, %v1354
        %v1356 = vrot.slane %v1355, 2
        %v1357 = vadd.f32 %v1355, %v1356
        %v1358 = vrot.slane %v1357, 1
        %v1359 = vadd.f32 %v1357, %v1358
        %v1360 = vadd.f32 %v1244, %v1245
        %v1361 = vadd.f32 %v1360, %v1246
        %v1362 = vadd.f32 %v1361, %v1247
        %v1363 = vadd.f32 %v1362, %v1248
        %v1364 = vadd.f32 %v1363, %v1249
        %v1365 = vadd.f32 %v1364, %v1250
        %v1366 = vadd.f32 %v1365, %v1251
        %v1367 = vadd.f32 %v1366, %v1252
        %v1368 = vadd.f32 %v1367, %v1253
        %v1369 = vadd.f32 %v1368, %v1254
        %v1370 = vadd.f32 %v1369, %v1255
        %v1371 = vrot.slane %v1370, 4
        %v1372 = vadd.f32 %v1370, %v1371
        %v1373 = vrot.slane %v1372, 2
        %v1374 = vadd.f32 %v1372, %v1373
        %v1375 = vrot.slane %v1374, 1
        %v1376 = vadd.f32 %v1374, %v1375
        %v1377 = vadd.f32 %v1256, %v1257
        %v1378 = vadd.f32 %v1377, %v1258
        %v1379 = vadd.f32 %v1378, %v1259
        %v1380 = vadd.f32 %v1379, %v1260
        %v1381 = vadd.f32 %v1380, %v1261
        %v1382 = vadd.f32 %v1381, %v1262
        %v1383 = vadd.f32 %v1382, %v1263
        %v1384 = vadd.f32 %v1383, %v1264
        %v1385 = vadd.f32 %v1384, %v1265
        %v1386 = vadd.f32 %v1385, %v1266
        %v1387 = vadd.f32 %v1386, %v1267
        %v1388 = vrot.slane %v1387, 4
        %v1389 = vadd.f32 %v1387, %v1388
        %v1390 = vrot.slane %v1389, 2
        %v1391 = vadd.f32 %v1389, %v1390
        %v1392 = vrot.slane %v1391, 1
        %v1393 = vadd.f32 %v1391, %v1392
        %v1394 = vadd.f32 %v1268, %v1269
        %v1395 = vadd.f32 %v1394, %v1270
        %v1396 = vadd.f32 %v1395, %v1271
        %v1397 = vadd.f32 %v1396, %v1272
        %v1398 = vadd.f32 %v1397, %v1273
        %v1399 = vadd.f32 %v1398, %v1274
        %v1400 = vadd.f32 %v1399, %v1275
        %v1401 = vadd.f32 %v1400, %v1276
        %v1402 = vadd.f32 %v1401, %v1277
        %v1403 = vadd.f32 %v1402, %v1278
        %v1404 = vadd.f32 %v1403, %v1279
        %v1405 = vrot.slane %v1404, 4
        %v1406 = vadd.f32 %v1404, %v1405
        %v1407 = vrot.slane %v1406, 2
        %v1408 = vadd.f32 %v1406, %v1407
        %v1409 = vrot.slane %v1408, 1
        %v1410 = vadd.f32 %v1408, %v1409
        %v1411 = vadd.f32 %v1280, %v1281
        %v1412 = vadd.f32 %v1411, %v1282
        %v1413 = vadd.f32 %v1412, %v1283
        %v1414 = vadd.f32 %v1413, %v1284
        %v1415 = vadd.f32 %v1414, %v1285
        %v1416 = vadd.f32 %v1415, %v1286
        %v1417 = vadd.f32 %v1416, %v1287
        %v1418 = vadd.f32 %v1417, %v1288
        %v1419 = vadd.f32 %v1418, %v1289
        %v1420 = vadd.f32 %v1419, %v1290
        %v1421 = vadd.f32 %v1420, %v1291
        %v1422 = vrot.slane %v1421, 4
        %v1423 = vadd.f32 %v1421, %v1422
        %v1424 = vrot.slane %v1423, 2
        %v1425 = vadd.f32 %v1423, %v1424
        %v1426 = vrot.slane %v1425, 1
        %v1427 = vadd.f32 %v1425, %v1426
        %v1428 = vsub.f32 %v998, %v1308
        %v1429 = vsub.f32 %v999, %v1325
        %v1430 = vsub.f32 %v1000, %v1342
        %v1431 = vsub.f32 %v1001, %v1359
        %v1432 = vsub.f32 %v1002, %v1376
        %v1433 = vsub.f32 %v1003, %v1393
        %v1434 = vsub.f32 %v1004, %v1410
        %v1435 = vsub.f32 %v1005, %v1427
        %vm1444 = vcmask 1041409
        %v1445 = vsel %vm1444, %v1429, %v1428
        %vm1446 = vcmask 1042434
        %v1447 = vsel %vm1446, %v1430, %v1445
        %vm1448 = vcmask 1043459
        %v1449 = vsel %vm1448, %v1431, %v1447
        %vm1450 = vcmask 1044484
        %v1451 = vsel %vm1450, %v1432, %v1449
        %vm1452 = vcmask 1045509
        %v1453 = vsel %vm1452, %v1433, %v1451
        %vm1454 = vcmask 1046534
        %v1455 = vsel %vm1454, %v1434, %v1453
        %vm1456 = vcmask 1047559
        %v1457 = vsel %vm1456, %v1435, %v1455
        %v1459 = vsel %vm420, %v1457, 0.0
        %v1460 = vld [vmem:[#allocation2] sm:$0xff]
        %1461 = vadd.xlane.f32.xlu0 %v1459
        %v1462 = vpop.xlane.xlu0 %1461
        %v1463 = vadd.f32 %v1460, %v1462
        %vm1464 = vcmask 7168
        %1465 = vst.msk [vmem:[#allocation2] sm:$0xff] %vm1464, %v1463
        %v1466 = vld [vmem:[#allocation3] sm:$0xff]
        %v1467 = vsel %vm420, 1, 0
        %v1468 = vcvt.s32.f32 %v1467
        %1469 = vadd.xlane.f32.xlu0 %v1468
        %v1470 = vpop.xlane.xlu0 %1469
        %v1471 = vadd.f32 %v1466, %v1470
        %1472 = vst.msk [vmem:[#allocation3] sm:$0xff] %vm1464, %v1471
        %p1473 = scmp.eq.s32.totalorder %s24, 1
        // Predicated region
        $region41: #{tpu_custom_call.1} parent=27 // pred_check
          %p1474 = pneg %p1473
        $region42: #{tpu_custom_call.1} parent=27 // pred_check_branch
          %1476 = sbr.rel (%p1474) target = $region44
        $region43: #{tpu_custom_call.1} parent=27 // pred_region
          %v1477 = vld [vmem:[#allocation2] sm:$0xff]
          %v1478 = vld [vmem:[#allocation3] sm:$0xff]
          %v1479 = vrcp.pop %v1478
          %v1480 = vmul.f32 %v1477, %v1479
          %1481 = vst.msk [vmem:[%s219] sm:$0xff] %vm1464, %v1480
        $region44: #{tpu_custom_call.1} parent=27 // pred_fallthru
          _
        %p1482 = scmp.lt.s32.totalorder %s23, 1
        %s1483 = scalar_select %p1482, %s23, 1
        %s1484 = smul.addr %s1483, 8
        %s1485 = scalar_lea.vmem %s2, %s1484
        // Predicated region
        $region45: #{tpu_custom_call.1} parent=27 // pred_check
          %p1486 = pneg %p105
        $region46: #{tpu_custom_call.1} parent=27 // pred_check_branch
          %1488 = sbr.rel (%p1486) target = $region48
        $region47: #{tpu_custom_call.1} parent=27 // pred_region
          _
        $region48: #{tpu_custom_call.1} parent=27 // pred_fallthru
          _
      $region28: #{tpu_custom_call.1} parent=5 // pred_fallthru
        _
      %p1489 = scmp.le.s32.totalorder 2, %s14
      // Predicated region
      $region49: #{tpu_custom_call.1} parent=5 // pred_check
        %p1490 = pneg %p1489
      $region50: #{tpu_custom_call.1} parent=5 // pred_check_branch
        %1492 = sbr.rel (%p1490) target = $region52
      $region51: #{tpu_custom_call.1} parent=5 // pred_region
        %s1493 = ssub.s32 %s14, 2
        // Predicated region
        $region53: #{tpu_custom_call.1} parent=51 // pred_check
          %p1494 = pneg %p111
        $region54: #{tpu_custom_call.1} parent=51 // pred_check_branch
          %1496 = sbr.rel (%p1494) target = $region56
        $region55: #{tpu_custom_call.1} parent=51 // pred_region
          %p1497 = scmp.lt.s32.totalorder %s25, 1
          %s1498 = scalar_select %p1497, %s25, 1
          %s1499 = smul.addr %s1498, 8
          %s1500 = scalar_lea.vmem %s2, %s1499
        $region56: #{tpu_custom_call.1} parent=51 // pred_fallthru
          _
      $region52: #{tpu_custom_call.1} parent=5 // pred_fallthru
        _
    $region6: #{tpu_custom_call.1} parent=1 // loop_footer
      %s18 = sadd.s32 1, %s14
    $region7: #{tpu_custom_call.1} parent=1 // loop_footer_branch
      %13 = sbr.rel target = $region3
    $region8: #{tpu_custom_call.1} parent=1 // loop_exit
      _
    %1501 = vsyncpa [#allocation5], 1
    %s1502 = scalar_lea.sflag [#allocation5], 1
    %1503 = vsyncpa %s1502, 1
    %1504 = vsyncpa [#allocation7], 1
    %s1505 = scalar_lea.sflag [#allocation7], 1
    %1506 = vsyncpa %s1505, 1

</llo_original>
